<compile_context>
chip_gen: v5e
topology: v5e:2x2
jax: 0.10.0
libtpu: 0.0.40
codegen_flags: <defaults>
</compile_context>

<pallas_src>
import jax
import jax.numpy as jnp
from jax.experimental import pallas as pl
from jax.experimental.pallas import tpu as pltpu

EPS = 1e-5
LANE = 128


# ------------------------------ Pallas kernel -------------------------------

def _fused_forward_kernel(
    x1_ref,                               # (10N, 140) bf16  conv1 operand, rows (a,h1,n), cols (di,w_im,c)
    w1_ref, b1_ref, g1_ref, be1_ref,      # (140,320) bf16, (1,320) f32, (1,32) f32 x2
    w2_ref, b2_ref, g2_ref, be2_ref,      # (896,256) bf16, (1,256) f32, (1,64) f32 x2
    w3_ref, b3_ref, g3_ref, be3_ref,      # (256,128) bf16, (1,128) f32 x3
    wl0_ref, bl0_ref,                     # (128,128) bf16, (1,128) f32   lin0 (lane-padded)
    wl1_ref, bl1_ref,                     # (128,128) bf16, (1,128) f32   lin1 (lane-padded)
    pre_ref, out_ref,                     # (N,128) f32, (N,128) f32      lane-padded outputs
):
    f32 = jnp.float32
    bf16 = jnp.bfloat16
    nb = pre_ref.shape[0]               # batch N
    r1 = x1_ref.shape[0]                # 10*N   rows (a, h1, n)
    h1n = r1 // 2                       # 5*N

    # ---- conv1: single block-Toeplitz matmul (K=140) + bias; cols ordered (b, w1, k) ----
    y1 = jnp.dot(x1_ref[...], w1_ref[...], preferred_element_type=f32) + b1_ref[...]   # (10N,320)

    # ---- BN1 (train-mode batch stats, per channel k): fold the 10 (b,w1) lane blocks ----
    s = jnp.sum(y1, axis=0, keepdims=True)
    q = jnp.sum(y1 * y1, axis=0, keepdims=True)
    s1 = s[:, 0:32]
    q1 = q[:, 0:32]
    for j in range(1, 10):
        s1 = s1 + s[:, j * 32:(j + 1) * 32]
        q1 = q1 + q[:, j * 32:(j + 1) * 32]
    inv1 = 1.0 / (10 * r1)                                   # count = N*10*10
    m1 = s1 * inv1
    v1 = jnp.maximum(q1 * inv1 - m1 * m1, 0.0)
    sc1 = jax.lax.rsqrt(v1 + EPS) * g1_ref[...]
    sh1 = be1_ref[...] - m1 * sc1
    sc1t = jnp.concatenate([sc1] * 10, axis=1)               # tile per-k scale to 320 lanes
    sh1t = jnp.concatenate([sh1] * 10, axis=1)
    y1 = jnp.maximum(y1 * sc1t + sh1t, 0.0)                  # BN + ReLU

    # ---- pool1 (2x2): max of the two row halves (oh parity a) and two lane halves (ow parity b)
    z1 = jnp.maximum(
        jnp.maximum(y1[0:h1n, 0:160], y1[h1n:r1, 0:160]),
        jnp.maximum(y1[0:h1n, 160:320], y1[h1n:r1, 160:320]))          # (5N,160) rows (h1,n), cols (w1,k)

    # ---- zero-pad to the 7x7 padded map (conv2 padding=1 handled by zero rows / lanes) ----
    zc = jnp.zeros((h1n, 32), f32)
    z1 = jnp.concatenate([zc, z1, zc], axis=1)                         # (5N, 224) cols (w_pad,k)
    zr = jnp.zeros((nb, 224), f32)
    z1p = jnp.concatenate([zr, z1, zr], axis=0)                        # (7N, 224) rows (h_pad,n)

    # ---- conv2: ONE K=896 matmul; x2 rows (oi,n), lane blocks = row taps di (static slices) ----
    x2 = jnp.concatenate([z1p[0:4 * nb], z1p[nb:5 * nb],
                          z1p[2 * nb:6 * nb], z1p[3 * nb:7 * nb]], axis=1)   # (4N, 896)
    y2 = jnp.dot(x2.astype(bf16), w2_ref[...], preferred_element_type=f32) + b2_ref[...]   # (4N,256)

    # ---- BN2 (per channel o): fold the 4 oj lane blocks ----
    s = jnp.sum(y2, axis=0, keepdims=True)
    q = jnp.sum(y2 * y2, axis=0, keepdims=True)
    s2 = s[:, 0:64]
    q2 = q[:, 0:64]
    for j in range(1, 4):
        s2 = s2 + s[:, j * 64:(j + 1) * 64]
        q2 = q2 + q[:, j * 64:(j + 1) * 64]
    inv2 = 1.0 / (16 * nb)                                   # count = N*4*4
    m2 = s2 * inv2
    v2 = jnp.maximum(q2 * inv2 - m2 * m2, 0.0)
    sc2 = jax.lax.rsqrt(v2 + EPS) * g2_ref[...]
    sh2 = be2_ref[...] - m2 * sc2
    sc2t = jnp.concatenate([sc2] * 4, axis=1)
    sh2t = jnp.concatenate([sh2] * 4, axis=1)
    y2 = jnp.maximum(y2 * sc2t + sh2t, 0.0)                  # BN + ReLU

    # ---- pool2 (2x2): row pairs (oi) and lane pairs (oj); result cols (pi,pj,c) == conv3 im2col ----
    t0 = jnp.maximum(y2[0:nb], y2[nb:2 * nb])                # pi = 0
    t1 = jnp.maximum(y2[2 * nb:3 * nb], y2[3 * nb:4 * nb])   # pi = 1
    z3 = jnp.concatenate([jnp.maximum(t0[:, 0:64], t0[:, 64:128]),
                          jnp.maximum(t0[:, 128:192], t0[:, 192:256]),
                          jnp.maximum(t1[:, 0:64], t1[:, 64:128]),
                          jnp.maximum(t1[:, 128:192], t1[:, 192:256])], axis=1)   # (N, 256)

    # ---- conv3 (2x2 -> 1x1): ONE K=256 matmul + BN3 (centered two-pass over batch, no ReLU) ----
    y3 = jnp.dot(z3.astype(bf16), w3_ref[...], preferred_element_type=f32) + b3_ref[...]   # (N,128)
    m3 = jnp.sum(y3, axis=0, keepdims=True) * (1.0 / nb)
    d3 = y3 - m3
    v3 = jnp.sum(d3 * d3, axis=0, keepdims=True) * (1.0 / nb)
    y3 = d3 * jax.lax.rsqrt(v3 + EPS) * g3_ref[...] + be3_ref[...]

    # ---- lin0 + ReLU (preout), lin1 (out); both lane-padded to 128 for unmasked stores ----
    h = jnp.dot(y3.astype(bf16), wl0_ref[...], preferred_element_type=f32) + bl0_ref[...]
    h = jnp.maximum(h, 0.0)
    pre_ref[...] = h
    out_ref[...] = jnp.dot(h.astype(bf16), wl1_ref[...], preferred_element_type=f32) + bl1_ref[...]


# --------------------------------- JAX glue ----------------------------------

def _vmem():
    return pl.BlockSpec(memory_space=pltpu.MemorySpace.VMEM)


def init_params(key):
    ks = jax.random.split(key, 8)

    def nrm(k, shape, scale=0.1):
        return scale * jax.random.normal(k, shape, dtype=jnp.float32)

    return {
        # conv weights stored HWIO
        "w1": nrm(ks[0], (5, 5, 2, 32)),  "b1": nrm(ks[1], (32,)),
        "g1": jnp.ones((32,), jnp.float32), "be1": jnp.zeros((32,), jnp.float32),
        "w2": nrm(ks[2], (4, 4, 32, 64)), "b2": nrm(ks[3], (64,)),
        "g2": jnp.ones((64,), jnp.float32), "be2": jnp.zeros((64,), jnp.float32),
        "w3": nrm(ks[4], (2, 2, 64, 128)), "b3": nrm(ks[5], (128,)),
        "g3": jnp.ones((128,), jnp.float32), "be3": jnp.zeros((128,), jnp.float32),
        "wl0": nrm(ks[6], (128, 20)), "bl0": jnp.zeros((20,), jnp.float32),
        "wl1": nrm(ks[7], (20, 2)),   "bl1": jnp.zeros((2,), jnp.float32),
    }


def forward(params, x_nchw):
    """Returns (preout, out) just like B_auxiliary_loss.forward (train-mode BN)."""
    x = jnp.transpose(x_nchw, (0, 2, 3, 1)).astype(jnp.float32)        # NCHW -> NHWC
    n, hh, ww, cc = x.shape
    assert (hh, ww, cc) == (14, 14, 2), "module implies 2x14x14 inputs"
    bf16 = jnp.bfloat16

    # conv1 operand: rows (a, h1, n) with oh = 2*h1 + a, cols (di, w_im, c); K = 5*14*2 = 140
    slabs = []
    for di in range(5):
        s = x[:, di:di + 10, :, :].reshape(n, 5, 2, 14, 2)             # (n, h1, a, w_im, c)
        slabs.append(jnp.transpose(s, (2, 1, 0, 3, 4)).reshape(10 * n, 28))
    x1r = jnp.concatenate(slabs, axis=1).astype(bf16)                  # (10N, 140)

    # conv1 block-Toeplitz weight: rows (di, w_im, c), cols (b, w1, k) so pool1 = two lane halves
    cols = []
    for b in range(2):
        for w1p in range(5):
            ow = 2 * w1p + b
            blk = jnp.zeros((5, 14, 2, 32), jnp.float32).at[:, ow:ow + 5, :, :].set(params["w1"])
            cols.append(blk.reshape(140, 32))
    w1t = jnp.concatenate(cols, axis=1).astype(bf16)                   # (140, 320)

    # conv2 block-Toeplitz weight: rows (di, w_pad, c) = 4*7*32 = 896, cols (oj, o) = 256
    cols = []
    for oj in range(4):
        blk = jnp.zeros((4, 7, 32, 64), jnp.float32).at[:, oj:oj + 4, :, :].set(params["w2"])
        cols.append(blk.reshape(896, 64))
    w2t = jnp.concatenate(cols, axis=1).astype(bf16)                   # (896, 256)

    w3f = params["w3"].reshape(256, 128).astype(bf16)                  # rows (pi, pj, c)

    # lane-dense (128-wide) head weights / biases; padded entries are exactly zero
    wl0p = jnp.pad(params["wl0"], ((0, 0), (0, LANE - 20))).astype(bf16)            # (128,128)
    bl0p = jnp.pad(params["bl0"], ((0, LANE - 20),))[None, :]
    wl1p = jnp.pad(params["wl1"], ((0, LANE - 20), (0, LANE - 2))).astype(bf16)     # (128,128)
    bl1p = jnp.pad(params["bl1"], ((0, LANE - 2),))[None, :]

    b1t = jnp.tile(params["b1"][None, :], (1, 10))                     # (1,320)
    b2t = jnp.tile(params["b2"][None, :], (1, 4))                      # (1,256)

    def row(v):
        return v[None, :]

    pre_pad, out_pad = pl.pallas_call(
        _fused_forward_kernel,
        out_shape=(jax.ShapeDtypeStruct((n, LANE), jnp.float32),
                   jax.ShapeDtypeStruct((n, LANE), jnp.float32)),
        in_specs=[_vmem()] * 17,
        out_specs=(_vmem(), _vmem()),
        compiler_params=pltpu.CompilerParams(vmem_limit_bytes=32 * 1024 * 1024),
    )(x1r, w1t, b1t, row(params["g1"]), row(params["be1"]),
      w2t, b2t, row(params["g2"]), row(params["be2"]),
      w3f, row(params["b3"]), row(params["g3"]), row(params["be3"]),
      wl0p, bl0p, wl1p, bl1p)

    return pre_pad[:, :20], out_pad[:, :2]


# ----------------------- pure-JAX reference (for checking) ------------------

def _reference(params, x_nchw):
    x = jnp.transpose(x_nchw, (0, 2, 3, 1)).astype(jnp.float32)
    dn = ("NHWC", "HWIO", "NHWC")
    hi = jax.lax.Precision.HIGHEST

    def bn(y, g, b):
        ax = tuple(range(y.ndim - 1))
        m = jnp.mean(y, axis=ax, keepdims=True)
        v = jnp.mean((y - m) ** 2, axis=ax, keepdims=True)
        return (y - m) * jax.lax.rsqrt(v + EPS) * g + b

    def pool(y):
        n, h, w, c = y.shape
        return y.reshape(n, h // 2, 2, w // 2, 2, c).max(axis=(2, 4))

    y = jax.lax.conv_general_dilated(x, params["w1"], (1, 1), "VALID",
                                     dimension_numbers=dn, precision=hi) + params["b1"]
    y = pool(jax.nn.relu(bn(y, params["g1"], params["be1"])))
    y = jax.lax.conv_general_dilated(y, params["w2"], (1, 1), [(1, 1), (1, 1)],
                                     dimension_numbers=dn, precision=hi) + params["b2"]
    y = pool(jax.nn.relu(bn(y, params["g2"], params["be2"])))
    y = jax.lax.conv_general_dilated(y, params["w3"], (1, 1), "VALID",
                                     dimension_numbers=dn, precision=hi) + params["b3"]
    y = bn(y, params["g3"], params["be3"]).reshape(x.shape[0], 128)
    pre = jax.nn.relu(y @ params["wl0"] + params["bl0"])
    return pre, pre @ params["wl1"] + params["bl1"]


if __name__ == "__main__":
    key = jax.random.PRNGKey(0)
    pkey, xkey = jax.random.split(key)
    params = init_params(pkey)
    # PyTorch-style NCHW input: the module's architecture implies 2x14x14 images.
    # batch=8 keeps every in-kernel row slice sublane-aligned (multiples of 8).
    x = jax.random.normal(xkey, (8, 2, 14, 14), dtype=jnp.float32)

    preout, out = jax.jit(forward)(params, x)
    jax.block_until_ready((preout, out))

    assert preout.shape == (8, 20) and preout.dtype == jnp.float32
    assert out.shape == (8, 2) and out.dtype == jnp.float32

    ref_pre, ref_out = jax.jit(_reference)(params, x)
    # Accuracy contract: bf16 matmul operands (f32 accumulation) vs. f32-HIGHEST reference.
    assert jnp.allclose(preout, ref_pre, atol=3e-2, rtol=3e-2)
    assert jnp.allclose(out, ref_out, atol=3e-2, rtol=3e-2)
    print("KERNEL_OK")
</pallas_src>

<mosaic_0001>
module attributes {stable_mosaic.version = 11 : i64} {
  func.func @_fused_forward_kernel(%arg0: memref<80x140xbf16, #tpu.memory_space<vmem>>, %arg1: memref<140x320xbf16, #tpu.memory_space<vmem>>, %arg2: memref<1x320xf32, #tpu.memory_space<vmem>>, %arg3: memref<1x32xf32, #tpu.memory_space<vmem>>, %arg4: memref<1x32xf32, #tpu.memory_space<vmem>>, %arg5: memref<896x256xbf16, #tpu.memory_space<vmem>>, %arg6: memref<1x256xf32, #tpu.memory_space<vmem>>, %arg7: memref<1x64xf32, #tpu.memory_space<vmem>>, %arg8: memref<1x64xf32, #tpu.memory_space<vmem>>, %arg9: memref<256x128xbf16, #tpu.memory_space<vmem>>, %arg10: memref<1x128xf32, #tpu.memory_space<vmem>>, %arg11: memref<1x128xf32, #tpu.memory_space<vmem>>, %arg12: memref<1x128xf32, #tpu.memory_space<vmem>>, %arg13: memref<128x128xbf16, #tpu.memory_space<vmem>>, %arg14: memref<1x128xf32, #tpu.memory_space<vmem>>, %arg15: memref<128x128xbf16, #tpu.memory_space<vmem>>, %arg16: memref<1x128xf32, #tpu.memory_space<vmem>>, %arg17: memref<8x128xf32, #tpu.memory_space<vmem>>, %arg18: memref<8x128xf32, #tpu.memory_space<vmem>>) attributes {dimension_semantics = [], scalar_prefetch = 0 : i64, scratch_operands = 0 : i64, tpu.core_type = #tpu.core_type<tc>} {
    %c0 = arith.constant 0 : index
    %c0_0 = arith.constant 0 : index
    %0 = vector.load %arg0[%c0, %c0_0] : memref<80x140xbf16, #tpu.memory_space<vmem>>, vector<80x140xbf16>
    %c0_1 = arith.constant 0 : index
    %c0_2 = arith.constant 0 : index
    %1 = vector.load %arg1[%c0_1, %c0_2] : memref<140x320xbf16, #tpu.memory_space<vmem>>, vector<140x320xbf16>
    %cst = arith.constant dense<0.000000e+00> : vector<80x320xf32>
    %2 = tpu.matmul %0, %1, %cst {dimension_numbers = #tpu.dot_dimension_numbers<[1], [0], [0], [1], [0, 0, 1, 1], [], []>} : vector<80x140xbf16>, vector<140x320xbf16>, vector<80x320xf32> -> vector<80x320xf32>
    %c0_3 = arith.constant 0 : index
    %c0_4 = arith.constant 0 : index
    %3 = vector.load %arg2[%c0_3, %c0_4] : memref<1x320xf32, #tpu.memory_space<vmem>>, vector<1x320xf32>
    %4 = vector.broadcast %3 : vector<1x320xf32> to vector<80x320xf32>
    %5 = arith.addf %2, %4 : vector<80x320xf32>
    %cst_5 = arith.constant dense<0.000000e+00> : vector<320xf32>
    %6 = vector.multi_reduction <add>, %5, %cst_5 [0] : vector<80x320xf32> to vector<320xf32>
    %7 = vector.shape_cast %6 : vector<320xf32> to vector<1x320xf32>
    %8 = arith.mulf %5, %5 : vector<80x320xf32>
    %cst_6 = arith.constant dense<0.000000e+00> : vector<320xf32>
    %9 = vector.multi_reduction <add>, %8, %cst_6 [0] : vector<80x320xf32> to vector<320xf32>
    %10 = vector.shape_cast %9 : vector<320xf32> to vector<1x320xf32>
    %11 = vector.extract_strided_slice %7 {offsets = [0, 0], sizes = [1, 32], strides = [1, 1]} : vector<1x320xf32> to vector<1x32xf32>
    %12 = vector.extract_strided_slice %10 {offsets = [0, 0], sizes = [1, 32], strides = [1, 1]} : vector<1x320xf32> to vector<1x32xf32>
    %13 = vector.extract_strided_slice %7 {offsets = [0, 32], sizes = [1, 32], strides = [1, 1]} : vector<1x320xf32> to vector<1x32xf32>
    %14 = arith.addf %11, %13 : vector<1x32xf32>
    %15 = vector.extract_strided_slice %10 {offsets = [0, 32], sizes = [1, 32], strides = [1, 1]} : vector<1x320xf32> to vector<1x32xf32>
    %16 = arith.addf %12, %15 : vector<1x32xf32>
    %17 = vector.extract_strided_slice %7 {offsets = [0, 64], sizes = [1, 32], strides = [1, 1]} : vector<1x320xf32> to vector<1x32xf32>
    %18 = arith.addf %14, %17 : vector<1x32xf32>
    %19 = vector.extract_strided_slice %10 {offsets = [0, 64], sizes = [1, 32], strides = [1, 1]} : vector<1x320xf32> to vector<1x32xf32>
    %20 = arith.addf %16, %19 : vector<1x32xf32>
    %21 = vector.extract_strided_slice %7 {offsets = [0, 96], sizes = [1, 32], strides = [1, 1]} : vector<1x320xf32> to vector<1x32xf32>
    %22 = arith.addf %18, %21 : vector<1x32xf32>
    %23 = vector.extract_strided_slice %10 {offsets = [0, 96], sizes = [1, 32], strides = [1, 1]} : vector<1x320xf32> to vector<1x32xf32>
    %24 = arith.addf %20, %23 : vector<1x32xf32>
    %25 = vector.extract_strided_slice %7 {offsets = [0, 128], sizes = [1, 32], strides = [1, 1]} : vector<1x320xf32> to vector<1x32xf32>
    %26 = arith.addf %22, %25 : vector<1x32xf32>
    %27 = vector.extract_strided_slice %10 {offsets = [0, 128], sizes = [1, 32], strides = [1, 1]} : vector<1x320xf32> to vector<1x32xf32>
    %28 = arith.addf %24, %27 : vector<1x32xf32>
    %29 = vector.extract_strided_slice %7 {offsets = [0, 160], sizes = [1, 32], strides = [1, 1]} : vector<1x320xf32> to vector<1x32xf32>
    %30 = arith.addf %26, %29 : vector<1x32xf32>
    %31 = vector.extract_strided_slice %10 {offsets = [0, 160], sizes = [1, 32], strides = [1, 1]} : vector<1x320xf32> to vector<1x32xf32>
    %32 = arith.addf %28, %31 : vector<1x32xf32>
    %33 = vector.extract_strided_slice %7 {offsets = [0, 192], sizes = [1, 32], strides = [1, 1]} : vector<1x320xf32> to vector<1x32xf32>
    %34 = arith.addf %30, %33 : vector<1x32xf32>
    %35 = vector.extract_strided_slice %10 {offsets = [0, 192], sizes = [1, 32], strides = [1, 1]} : vector<1x320xf32> to vector<1x32xf32>
    %36 = arith.addf %32, %35 : vector<1x32xf32>
    %37 = vector.extract_strided_slice %7 {offsets = [0, 224], sizes = [1, 32], strides = [1, 1]} : vector<1x320xf32> to vector<1x32xf32>
    %38 = arith.addf %34, %37 : vector<1x32xf32>
    %39 = vector.extract_strided_slice %10 {offsets = [0, 224], sizes = [1, 32], strides = [1, 1]} : vector<1x320xf32> to vector<1x32xf32>
    %40 = arith.addf %36, %39 : vector<1x32xf32>
    %41 = vector.extract_strided_slice %7 {offsets = [0, 256], sizes = [1, 32], strides = [1, 1]} : vector<1x320xf32> to vector<1x32xf32>
    %42 = arith.addf %38, %41 : vector<1x32xf32>
    %43 = vector.extract_strided_slice %10 {offsets = [0, 256], sizes = [1, 32], strides = [1, 1]} : vector<1x320xf32> to vector<1x32xf32>
    %44 = arith.addf %40, %43 : vector<1x32xf32>
    %45 = vector.extract_strided_slice %7 {offsets = [0, 288], sizes = [1, 32], strides = [1, 1]} : vector<1x320xf32> to vector<1x32xf32>
    %46 = arith.addf %42, %45 : vector<1x32xf32>
    %47 = vector.extract_strided_slice %10 {offsets = [0, 288], sizes = [1, 32], strides = [1, 1]} : vector<1x320xf32> to vector<1x32xf32>
    %48 = arith.addf %44, %47 : vector<1x32xf32>
    %cst_7 = arith.constant 1.250000e-03 : f32
    %49 = vector.broadcast %cst_7 : f32 to vector<1x32xf32>
    %50 = arith.mulf %46, %49 : vector<1x32xf32>
    %cst_8 = arith.constant 1.250000e-03 : f32
    %51 = vector.broadcast %cst_8 : f32 to vector<1x32xf32>
    %52 = arith.mulf %48, %51 : vector<1x32xf32>
    %53 = arith.mulf %50, %50 : vector<1x32xf32>
    %54 = arith.subf %52, %53 : vector<1x32xf32>
    %cst_9 = arith.constant 0.000000e+00 : f32
    %55 = vector.broadcast %cst_9 : f32 to vector<1x32xf32>
    %56 = arith.maximumf %54, %55 : vector<1x32xf32>
    %cst_10 = arith.constant 9.99999974E-6 : f32
    %57 = vector.broadcast %cst_10 : f32 to vector<1x32xf32>
    %58 = arith.addf %56, %57 : vector<1x32xf32>
    %59 = math.rsqrt %58 : vector<1x32xf32>
    %c0_11 = arith.constant 0 : index
    %c0_12 = arith.constant 0 : index
    %60 = vector.load %arg3[%c0_11, %c0_12] : memref<1x32xf32, #tpu.memory_space<vmem>>, vector<1x32xf32>
    %61 = arith.mulf %59, %60 : vector<1x32xf32>
    %c0_13 = arith.constant 0 : index
    %c0_14 = arith.constant 0 : index
    %62 = vector.load %arg4[%c0_13, %c0_14] : memref<1x32xf32, #tpu.memory_space<vmem>>, vector<1x32xf32>
    %63 = arith.mulf %50, %61 : vector<1x32xf32>
    %64 = arith.subf %62, %63 : vector<1x32xf32>
    %65 = tpu.concatenate %61, %61, %61, %61, %61, %61, %61, %61, %61, %61 in 1 : vector<1x32xf32>, vector<1x32xf32>, vector<1x32xf32>, vector<1x32xf32>, vector<1x32xf32>, vector<1x32xf32>, vector<1x32xf32>, vector<1x32xf32>, vector<1x32xf32>, vector<1x32xf32> -> vector<1x320xf32>
    %66 = tpu.concatenate %64, %64, %64, %64, %64, %64, %64, %64, %64, %64 in 1 : vector<1x32xf32>, vector<1x32xf32>, vector<1x32xf32>, vector<1x32xf32>, vector<1x32xf32>, vector<1x32xf32>, vector<1x32xf32>, vector<1x32xf32>, vector<1x32xf32>, vector<1x32xf32> -> vector<1x320xf32>
    %67 = vector.broadcast %65 : vector<1x320xf32> to vector<80x320xf32>
    %68 = arith.mulf %5, %67 : vector<80x320xf32>
    %69 = vector.broadcast %66 : vector<1x320xf32> to vector<80x320xf32>
    %70 = arith.addf %68, %69 : vector<80x320xf32>
    %cst_15 = arith.constant 0.000000e+00 : f32
    %71 = vector.broadcast %cst_15 : f32 to vector<80x320xf32>
    %72 = arith.maximumf %70, %71 : vector<80x320xf32>
    %73 = vector.extract_strided_slice %72 {offsets = [0, 0], sizes = [40, 160], strides = [1, 1]} : vector<80x320xf32> to vector<40x160xf32>
    %74 = vector.extract_strided_slice %72 {offsets = [40, 0], sizes = [40, 160], strides = [1, 1]} : vector<80x320xf32> to vector<40x160xf32>
    %75 = arith.maximumf %73, %74 : vector<40x160xf32>
    %76 = vector.extract_strided_slice %72 {offsets = [0, 160], sizes = [40, 160], strides = [1, 1]} : vector<80x320xf32> to vector<40x160xf32>
    %77 = vector.extract_strided_slice %72 {offsets = [40, 160], sizes = [40, 160], strides = [1, 1]} : vector<80x320xf32> to vector<40x160xf32>
    %78 = arith.maximumf %76, %77 : vector<40x160xf32>
    %79 = arith.maximumf %75, %78 : vector<40x160xf32>
    %cst_16 = arith.constant 0.000000e+00 : f32
    %80 = vector.broadcast %cst_16 : f32 to vector<40x32xf32>
    %81 = tpu.concatenate %80, %79, %80 in 1 : vector<40x32xf32>, vector<40x160xf32>, vector<40x32xf32> -> vector<40x224xf32>
    %cst_17 = arith.constant 0.000000e+00 : f32
    %82 = vector.broadcast %cst_17 : f32 to vector<8x224xf32>
    %83 = tpu.concatenate %82, %81, %82 in 0 : vector<8x224xf32>, vector<40x224xf32>, vector<8x224xf32> -> vector<56x224xf32>
    %84 = vector.extract_strided_slice %83 {offsets = [0, 0], sizes = [32, 224], strides = [1, 1]} : vector<56x224xf32> to vector<32x224xf32>
    %85 = vector.extract_strided_slice %83 {offsets = [8, 0], sizes = [32, 224], strides = [1, 1]} : vector<56x224xf32> to vector<32x224xf32>
    %86 = vector.extract_strided_slice %83 {offsets = [16, 0], sizes = [32, 224], strides = [1, 1]} : vector<56x224xf32> to vector<32x224xf32>
    %87 = vector.extract_strided_slice %83 {offsets = [24, 0], sizes = [32, 224], strides = [1, 1]} : vector<56x224xf32> to vector<32x224xf32>
    %88 = tpu.concatenate %84, %85, %86, %87 in 1 : vector<32x224xf32>, vector<32x224xf32>, vector<32x224xf32>, vector<32x224xf32> -> vector<32x896xf32>
    %89 = arith.truncf %88 : vector<32x896xf32> to vector<32x896xbf16>
    %c0_18 = arith.constant 0 : index
    %c0_19 = arith.constant 0 : index
    %90 = vector.load %arg5[%c0_18, %c0_19] : memref<896x256xbf16, #tpu.memory_space<vmem>>, vector<896x256xbf16>
    %cst_20 = arith.constant dense<0.000000e+00> : vector<32x256xf32>
    %91 = tpu.matmul %89, %90, %cst_20 {dimension_numbers = #tpu.dot_dimension_numbers<[1], [0], [0], [1], [0, 0, 1, 1], [], []>} : vector<32x896xbf16>, vector<896x256xbf16>, vector<32x256xf32> -> vector<32x256xf32>
    %c0_21 = arith.constant 0 : index
    %c0_22 = arith.constant 0 : index
    %92 = vector.load %arg6[%c0_21, %c0_22] : memref<1x256xf32, #tpu.memory_space<vmem>>, vector<1x256xf32>
    %93 = vector.broadcast %92 : vector<1x256xf32> to vector<32x256xf32>
    %94 = arith.addf %91, %93 : vector<32x256xf32>
    %cst_23 = arith.constant dense<0.000000e+00> : vector<256xf32>
    %95 = vector.multi_reduction <add>, %94, %cst_23 [0] : vector<32x256xf32> to vector<256xf32>
    %96 = vector.shape_cast %95 : vector<256xf32> to vector<1x256xf32>
    %97 = arith.mulf %94, %94 : vector<32x256xf32>
    %cst_24 = arith.constant dense<0.000000e+00> : vector<256xf32>
    %98 = vector.multi_reduction <add>, %97, %cst_24 [0] : vector<32x256xf32> to vector<256xf32>
    %99 = vector.shape_cast %98 : vector<256xf32> to vector<1x256xf32>
    %100 = vector.extract_strided_slice %96 {offsets = [0, 0], sizes = [1, 64], strides = [1, 1]} : vector<1x256xf32> to vector<1x64xf32>
    %101 = vector.extract_strided_slice %99 {offsets = [0, 0], sizes = [1, 64], strides = [1, 1]} : vector<1x256xf32> to vector<1x64xf32>
    %102 = vector.extract_strided_slice %96 {offsets = [0, 64], sizes = [1, 64], strides = [1, 1]} : vector<1x256xf32> to vector<1x64xf32>
    %103 = arith.addf %100, %102 : vector<1x64xf32>
    %104 = vector.extract_strided_slice %99 {offsets = [0, 64], sizes = [1, 64], strides = [1, 1]} : vector<1x256xf32> to vector<1x64xf32>
    %105 = arith.addf %101, %104 : vector<1x64xf32>
    %106 = vector.extract_strided_slice %96 {offsets = [0, 128], sizes = [1, 64], strides = [1, 1]} : vector<1x256xf32> to vector<1x64xf32>
    %107 = arith.addf %103, %106 : vector<1x64xf32>
    %108 = vector.extract_strided_slice %99 {offsets = [0, 128], sizes = [1, 64], strides = [1, 1]} : vector<1x256xf32> to vector<1x64xf32>
    %109 = arith.addf %105, %108 : vector<1x64xf32>
    %110 = vector.extract_strided_slice %96 {offsets = [0, 192], sizes = [1, 64], strides = [1, 1]} : vector<1x256xf32> to vector<1x64xf32>
    %111 = arith.addf %107, %110 : vector<1x64xf32>
    %112 = vector.extract_strided_slice %99 {offsets = [0, 192], sizes = [1, 64], strides = [1, 1]} : vector<1x256xf32> to vector<1x64xf32>
    %113 = arith.addf %109, %112 : vector<1x64xf32>
    %cst_25 = arith.constant 7.812500e-03 : f32
    %114 = vector.broadcast %cst_25 : f32 to vector<1x64xf32>
    %115 = arith.mulf %111, %114 : vector<1x64xf32>
    %cst_26 = arith.constant 7.812500e-03 : f32
    %116 = vector.broadcast %cst_26 : f32 to vector<1x64xf32>
    %117 = arith.mulf %113, %116 : vector<1x64xf32>
    %118 = arith.mulf %115, %115 : vector<1x64xf32>
    %119 = arith.subf %117, %118 : vector<1x64xf32>
    %cst_27 = arith.constant 0.000000e+00 : f32
    %120 = vector.broadcast %cst_27 : f32 to vector<1x64xf32>
    %121 = arith.maximumf %119, %120 : vector<1x64xf32>
    %cst_28 = arith.constant 9.99999974E-6 : f32
    %122 = vector.broadcast %cst_28 : f32 to vector<1x64xf32>
    %123 = arith.addf %121, %122 : vector<1x64xf32>
    %124 = math.rsqrt %123 : vector<1x64xf32>
    %c0_29 = arith.constant 0 : index
    %c0_30 = arith.constant 0 : index
    %125 = vector.load %arg7[%c0_29, %c0_30] : memref<1x64xf32, #tpu.memory_space<vmem>>, vector<1x64xf32>
    %126 = arith.mulf %124, %125 : vector<1x64xf32>
    %c0_31 = arith.constant 0 : index
    %c0_32 = arith.constant 0 : index
    %127 = vector.load %arg8[%c0_31, %c0_32] : memref<1x64xf32, #tpu.memory_space<vmem>>, vector<1x64xf32>
    %128 = arith.mulf %115, %126 : vector<1x64xf32>
    %129 = arith.subf %127, %128 : vector<1x64xf32>
    %130 = tpu.concatenate %126, %126, %126, %126 in 1 : vector<1x64xf32>, vector<1x64xf32>, vector<1x64xf32>, vector<1x64xf32> -> vector<1x256xf32>
    %131 = tpu.concatenate %129, %129, %129, %129 in 1 : vector<1x64xf32>, vector<1x64xf32>, vector<1x64xf32>, vector<1x64xf32> -> vector<1x256xf32>
    %132 = vector.broadcast %130 : vector<1x256xf32> to vector<32x256xf32>
    %133 = arith.mulf %94, %132 : vector<32x256xf32>
    %134 = vector.broadcast %131 : vector<1x256xf32> to vector<32x256xf32>
    %135 = arith.addf %133, %134 : vector<32x256xf32>
    %cst_33 = arith.constant 0.000000e+00 : f32
    %136 = vector.broadcast %cst_33 : f32 to vector<32x256xf32>
    %137 = arith.maximumf %135, %136 : vector<32x256xf32>
    %138 = vector.extract_strided_slice %137 {offsets = [0, 0], sizes = [8, 256], strides = [1, 1]} : vector<32x256xf32> to vector<8x256xf32>
    %139 = vector.extract_strided_slice %137 {offsets = [8, 0], sizes = [8, 256], strides = [1, 1]} : vector<32x256xf32> to vector<8x256xf32>
    %140 = arith.maximumf %138, %139 : vector<8x256xf32>
    %141 = vector.extract_strided_slice %137 {offsets = [16, 0], sizes = [8, 256], strides = [1, 1]} : vector<32x256xf32> to vector<8x256xf32>
    %142 = vector.extract_strided_slice %137 {offsets = [24, 0], sizes = [8, 256], strides = [1, 1]} : vector<32x256xf32> to vector<8x256xf32>
    %143 = arith.maximumf %141, %142 : vector<8x256xf32>
    %144 = vector.extract_strided_slice %140 {offsets = [0, 0], sizes = [8, 64], strides = [1, 1]} : vector<8x256xf32> to vector<8x64xf32>
    %145 = vector.extract_strided_slice %140 {offsets = [0, 64], sizes = [8, 64], strides = [1, 1]} : vector<8x256xf32> to vector<8x64xf32>
    %146 = arith.maximumf %144, %145 : vector<8x64xf32>
    %147 = vector.extract_strided_slice %140 {offsets = [0, 128], sizes = [8, 64], strides = [1, 1]} : vector<8x256xf32> to vector<8x64xf32>
    %148 = vector.extract_strided_slice %140 {offsets = [0, 192], sizes = [8, 64], strides = [1, 1]} : vector<8x256xf32> to vector<8x64xf32>
    %149 = arith.maximumf %147, %148 : vector<8x64xf32>
    %150 = vector.extract_strided_slice %143 {offsets = [0, 0], sizes = [8, 64], strides = [1, 1]} : vector<8x256xf32> to vector<8x64xf32>
    %151 = vector.extract_strided_slice %143 {offsets = [0, 64], sizes = [8, 64], strides = [1, 1]} : vector<8x256xf32> to vector<8x64xf32>
    %152 = arith.maximumf %150, %151 : vector<8x64xf32>
    %153 = vector.extract_strided_slice %143 {offsets = [0, 128], sizes = [8, 64], strides = [1, 1]} : vector<8x256xf32> to vector<8x64xf32>
    %154 = vector.extract_strided_slice %143 {offsets = [0, 192], sizes = [8, 64], strides = [1, 1]} : vector<8x256xf32> to vector<8x64xf32>
    %155 = arith.maximumf %153, %154 : vector<8x64xf32>
    %156 = tpu.concatenate %146, %149, %152, %155 in 1 : vector<8x64xf32>, vector<8x64xf32>, vector<8x64xf32>, vector<8x64xf32> -> vector<8x256xf32>
    %157 = arith.truncf %156 : vector<8x256xf32> to vector<8x256xbf16>
    %c0_34 = arith.constant 0 : index
    %c0_35 = arith.constant 0 : index
    %158 = vector.load %arg9[%c0_34, %c0_35] : memref<256x128xbf16, #tpu.memory_space<vmem>>, vector<256x128xbf16>
    %cst_36 = arith.constant dense<0.000000e+00> : vector<8x128xf32>
    %159 = tpu.matmul %157, %158, %cst_36 {dimension_numbers = #tpu.dot_dimension_numbers<[1], [0], [0], [1], [0, 0, 1, 1], [], []>} : vector<8x256xbf16>, vector<256x128xbf16>, vector<8x128xf32> -> vector<8x128xf32>
    %c0_37 = arith.constant 0 : index
    %c0_38 = arith.constant 0 : index
    %160 = vector.load %arg10[%c0_37, %c0_38] : memref<1x128xf32, #tpu.memory_space<vmem>>, vector<1x128xf32>
    %161 = vector.broadcast %160 : vector<1x128xf32> to vector<8x128xf32>
    %162 = arith.addf %159, %161 : vector<8x128xf32>
    %cst_39 = arith.constant dense<0.000000e+00> : vector<128xf32>
    %163 = vector.multi_reduction <add>, %162, %cst_39 [0] : vector<8x128xf32> to vector<128xf32>
    %164 = vector.shape_cast %163 : vector<128xf32> to vector<1x128xf32>
    %cst_40 = arith.constant 1.250000e-01 : f32
    %165 = vector.broadcast %cst_40 : f32 to vector<1x128xf32>
    %166 = arith.mulf %164, %165 : vector<1x128xf32>
    %167 = vector.broadcast %166 : vector<1x128xf32> to vector<8x128xf32>
    %168 = arith.subf %162, %167 : vector<8x128xf32>
    %169 = arith.mulf %168, %168 : vector<8x128xf32>
    %cst_41 = arith.constant dense<0.000000e+00> : vector<128xf32>
    %170 = vector.multi_reduction <add>, %169, %cst_41 [0] : vector<8x128xf32> to vector<128xf32>
    %171 = vector.shape_cast %170 : vector<128xf32> to vector<1x128xf32>
    %cst_42 = arith.constant 1.250000e-01 : f32
    %172 = vector.broadcast %cst_42 : f32 to vector<1x128xf32>
    %173 = arith.mulf %171, %172 : vector<1x128xf32>
    %cst_43 = arith.constant 9.99999974E-6 : f32
    %174 = vector.broadcast %cst_43 : f32 to vector<1x128xf32>
    %175 = arith.addf %173, %174 : vector<1x128xf32>
    %176 = math.rsqrt %175 : vector<1x128xf32>
    %177 = vector.broadcast %176 : vector<1x128xf32> to vector<8x128xf32>
    %178 = arith.mulf %168, %177 : vector<8x128xf32>
    %c0_44 = arith.constant 0 : index
    %c0_45 = arith.constant 0 : index
    %179 = vector.load %arg11[%c0_44, %c0_45] : memref<1x128xf32, #tpu.memory_space<vmem>>, vector<1x128xf32>
    %180 = vector.broadcast %179 : vector<1x128xf32> to vector<8x128xf32>
    %181 = arith.mulf %178, %180 : vector<8x128xf32>
    %c0_46 = arith.constant 0 : index
    %c0_47 = arith.constant 0 : index
    %182 = vector.load %arg12[%c0_46, %c0_47] : memref<1x128xf32, #tpu.memory_space<vmem>>, vector<1x128xf32>
    %183 = vector.broadcast %182 : vector<1x128xf32> to vector<8x128xf32>
    %184 = arith.addf %181, %183 : vector<8x128xf32>
    %185 = arith.truncf %184 : vector<8x128xf32> to vector<8x128xbf16>
    %c0_48 = arith.constant 0 : index
    %c0_49 = arith.constant 0 : index
    %186 = vector.load %arg13[%c0_48, %c0_49] : memref<128x128xbf16, #tpu.memory_space<vmem>>, vector<128x128xbf16>
    %cst_50 = arith.constant dense<0.000000e+00> : vector<8x128xf32>
    %187 = tpu.matmul %185, %186, %cst_50 {dimension_numbers = #tpu.dot_dimension_numbers<[1], [0], [0], [1], [0, 0, 1, 1], [], []>} : vector<8x128xbf16>, vector<128x128xbf16>, vector<8x128xf32> -> vector<8x128xf32>
    %c0_51 = arith.constant 0 : index
    %c0_52 = arith.constant 0 : index
    %188 = vector.load %arg14[%c0_51, %c0_52] : memref<1x128xf32, #tpu.memory_space<vmem>>, vector<1x128xf32>
    %189 = vector.broadcast %188 : vector<1x128xf32> to vector<8x128xf32>
    %190 = arith.addf %187, %189 : vector<8x128xf32>
    %cst_53 = arith.constant 0.000000e+00 : f32
    %191 = vector.broadcast %cst_53 : f32 to vector<8x128xf32>
    %192 = arith.maximumf %190, %191 : vector<8x128xf32>
    %c0_54 = arith.constant 0 : index
    %c0_55 = arith.constant 0 : index
    %193 = vector.load %arg17[%c0_54, %c0_55] : memref<8x128xf32, #tpu.memory_space<vmem>>, vector<8x128xf32>
    tpu.vector_store %arg17[%c0_54, %c0_55], %192 {strides = array<i32>} : memref<8x128xf32, #tpu.memory_space<vmem>>, vector<8x128xf32>,
    %194 = arith.truncf %192 : vector<8x128xf32> to vector<8x128xbf16>
    %c0_56 = arith.constant 0 : index
    %c0_57 = arith.constant 0 : index
    %195 = vector.load %arg15[%c0_56, %c0_57] : memref<128x128xbf16, #tpu.memory_space<vmem>>, vector<128x128xbf16>
    %cst_58 = arith.constant dense<0.000000e+00> : vector<8x128xf32>
    %196 = tpu.matmul %194, %195, %cst_58 {dimension_numbers = #tpu.dot_dimension_numbers<[1], [0], [0], [1], [0, 0, 1, 1], [], []>} : vector<8x128xbf16>, vector<128x128xbf16>, vector<8x128xf32> -> vector<8x128xf32>
    %c0_59 = arith.constant 0 : index
    %c0_60 = arith.constant 0 : index
    %197 = vector.load %arg16[%c0_59, %c0_60] : memref<1x128xf32, #tpu.memory_space<vmem>>, vector<1x128xf32>
    %198 = vector.broadcast %197 : vector<1x128xf32> to vector<8x128xf32>
    %199 = arith.addf %196, %198 : vector<8x128xf32>
    %c0_61 = arith.constant 0 : index
    %c0_62 = arith.constant 0 : index
    %200 = vector.load %arg18[%c0_61, %c0_62] : memref<8x128xf32, #tpu.memory_space<vmem>>, vector<8x128xf32>
    tpu.vector_store %arg18[%c0_61, %c0_62], %199 {strides = array<i32>} : memref<8x128xf32, #tpu.memory_space<vmem>>, vector<8x128xf32>,
    return
  }
}

</mosaic_0001>

<llo_original>
// kernel: forward.1
$region0: #{forward.1}
  #allocation0 [shape = 'u32[]', space=smem, size = 0x4, offset = 0x4, fixed_abs, tag = 'smem constant byte address 0x4 - core index']
  #allocation1 [shape = 'u32[72,128]{1,0:T(1,128)}', space=vmem, size = 0x9000, scoped, tag = 'internal scratch']
  %s0 = inlined_call_operand.vmem [shape: bf16[80,140], index: 0, kind: input, shape index: {}]
  %s1 = inlined_call_operand.vmem [shape: bf16[140,320], index: 1, kind: input, shape index: {}]
  %s2 = inlined_call_operand.vmem [shape: f32[1,320], index: 2, kind: input, shape index: {}]
  %s3 = inlined_call_operand.vmem [shape: f32[1,32], index: 3, kind: input, shape index: {}]
  %s4 = inlined_call_operand.vmem [shape: f32[1,32], index: 4, kind: input, shape index: {}]
  %s5 = inlined_call_operand.vmem [shape: bf16[896,256], index: 5, kind: input, shape index: {}]
  %s6 = inlined_call_operand.vmem [shape: f32[1,256], index: 6, kind: input, shape index: {}]
  %s7 = inlined_call_operand.vmem [shape: f32[1,64], index: 7, kind: input, shape index: {}]
  %s8 = inlined_call_operand.vmem [shape: f32[1,64], index: 8, kind: input, shape index: {}]
  %s9 = inlined_call_operand.vmem [shape: bf16[256,128], index: 9, kind: input, shape index: {}]
  %s10 = inlined_call_operand.vmem [shape: f32[1,128], index: 10, kind: input, shape index: {}]
  %s11 = inlined_call_operand.vmem [shape: f32[1,128], index: 11, kind: input, shape index: {}]
  %s12 = inlined_call_operand.vmem [shape: f32[1,128], index: 12, kind: input, shape index: {}]
  %s13 = inlined_call_operand.vmem [shape: bf16[128,128], index: 13, kind: input, shape index: {}]
  %s14 = inlined_call_operand.vmem [shape: f32[1,128], index: 14, kind: input, shape index: {}]
  %s15 = inlined_call_operand.vmem [shape: bf16[128,128], index: 15, kind: input, shape index: {}]
  %s16 = inlined_call_operand.vmem [shape: f32[1,128], index: 16, kind: input, shape index: {}]
  %s17 = inlined_call_operand.hbm [shape: f32[8,128], index: 17, kind: output, shape index: {0}]
  %s18 = inlined_call_operand.vmem [shape: f32[8,128], index: 18, kind: output, shape index: {1}]
  %19 = xla_tuple %s17, %s18
  %s20 = sld [smem:[#allocation0]]
  $region86: #{forward.1} parent=0
    _
  %s22 = ssub.s32 1, %s20
  %s23 = scalar_select 0, %s22, %s20
  $region1: #{forward.1} parent=0
    #allocation2 [shape = 'u8[4096]{0}', space=vmem, size = 0x1000, scoped, tag = 'output window, operand 0, single buffered']
    #allocation3 [shape = 's32[1]{0}', space=sflag, size = 0x4, scoped, tag = 'scoped memory for forward.1']
    %24 = vsyncpa [#allocation3], 0
    // Predicated region
    $region2: #{forward.1} parent=1 // pred_check
      _
    $region3: #{forward.1} parent=1 // pred_check_branch
      %26 = sbr.rel (0) target = $region5
    $region4: #{forward.1} parent=1 // pred_region
      _
    $region5: #{forward.1} parent=1 // pred_fallthru
      _
    // Predicated region
    $region6: #{forward.1} parent=1 // pred_check
      _
    $region7: #{forward.1} parent=1 // pred_check_branch
      %28 = sbr.rel (0) target = $region9
    $region8: #{forward.1} parent=1 // pred_region
      _
    $region9: #{forward.1} parent=1 // pred_fallthru
      _
    // Predicated region
    $region10: #{forward.1} parent=1 // pred_check
      _
    $region11: #{forward.1} parent=1 // pred_check_branch
      %30 = sbr.rel (0) target = $region13
    $region12: #{forward.1} parent=1 // pred_region
      _
    $region13: #{forward.1} parent=1 // pred_fallthru
      _
    // Predicated region
    $region14: #{forward.1} parent=1 // pred_check
      _
    $region15: #{forward.1} parent=1 // pred_check_branch
      %32 = sbr.rel (0) target = $region17
    $region16: #{forward.1} parent=1 // pred_region
      _
    $region17: #{forward.1} parent=1 // pred_fallthru
      _
    // Predicated region
    $region18: #{forward.1} parent=1 // pred_check
      _
    $region19: #{forward.1} parent=1 // pred_check_branch
      %34 = sbr.rel (0) target = $region21
    $region20: #{forward.1} parent=1 // pred_region
      _
    $region21: #{forward.1} parent=1 // pred_fallthru
      _
    // Predicated region
    $region22: #{forward.1} parent=1 // pred_check
      _
    $region23: #{forward.1} parent=1 // pred_check_branch
      %36 = sbr.rel (0) target = $region25
    $region24: #{forward.1} parent=1 // pred_region
      _
    $region25: #{forward.1} parent=1 // pred_fallthru
      _
    // Predicated region
    $region26: #{forward.1} parent=1 // pred_check
      _
    $region27: #{forward.1} parent=1 // pred_check_branch
      %38 = sbr.rel (0) target = $region29
    $region28: #{forward.1} parent=1 // pred_region
      _
    $region29: #{forward.1} parent=1 // pred_fallthru
      _
    // Predicated region
    $region30: #{forward.1} parent=1 // pred_check
      _
    $region31: #{forward.1} parent=1 // pred_check_branch
      %40 = sbr.rel (0) target = $region33
    $region32: #{forward.1} parent=1 // pred_region
      _
    $region33: #{forward.1} parent=1 // pred_fallthru
      _
    // Predicated region
    $region34: #{forward.1} parent=1 // pred_check
      _
    $region35: #{forward.1} parent=1 // pred_check_branch
      %42 = sbr.rel (0) target = $region37
    $region36: #{forward.1} parent=1 // pred_region
      _
    $region37: #{forward.1} parent=1 // pred_fallthru
      _
    // Predicated region
    $region38: #{forward.1} parent=1 // pred_check
      _
    $region39: #{forward.1} parent=1 // pred_check_branch
      %44 = sbr.rel (0) target = $region41
    $region40: #{forward.1} parent=1 // pred_region
      _
    $region41: #{forward.1} parent=1 // pred_fallthru
      _
    // Predicated region
    $region42: #{forward.1} parent=1 // pred_check
      _
    $region43: #{forward.1} parent=1 // pred_check_branch
      %46 = sbr.rel (0) target = $region45
    $region44: #{forward.1} parent=1 // pred_region
      _
    $region45: #{forward.1} parent=1 // pred_fallthru
      _
    // Predicated region
    $region46: #{forward.1} parent=1 // pred_check
      _
    $region47: #{forward.1} parent=1 // pred_check_branch
      %48 = sbr.rel (0) target = $region49
    $region48: #{forward.1} parent=1 // pred_region
      _
    $region49: #{forward.1} parent=1 // pred_fallthru
      _
    // Predicated region
    $region50: #{forward.1} parent=1 // pred_check
      _
    $region51: #{forward.1} parent=1 // pred_check_branch
      %50 = sbr.rel (0) target = $region53
    $region52: #{forward.1} parent=1 // pred_region
      _
    $region53: #{forward.1} parent=1 // pred_fallthru
      _
    // Predicated region
    $region54: #{forward.1} parent=1 // pred_check
      _
    $region55: #{forward.1} parent=1 // pred_check_branch
      %52 = sbr.rel (0) target = $region57
    $region56: #{forward.1} parent=1 // pred_region
      _
    $region57: #{forward.1} parent=1 // pred_fallthru
      _
    // Predicated region
    $region58: #{forward.1} parent=1 // pred_check
      _
    $region59: #{forward.1} parent=1 // pred_check_branch
      %54 = sbr.rel (0) target = $region61
    $region60: #{forward.1} parent=1 // pred_region
      _
    $region61: #{forward.1} parent=1 // pred_fallthru
      _
    // Predicated region
    $region62: #{forward.1} parent=1 // pred_check
      _
    $region63: #{forward.1} parent=1 // pred_check_branch
      %56 = sbr.rel (0) target = $region65
    $region64: #{forward.1} parent=1 // pred_region
      _
    $region65: #{forward.1} parent=1 // pred_fallthru
      _
    // Predicated region
    $region66: #{forward.1} parent=1 // pred_check
      _
    $region67: #{forward.1} parent=1 // pred_check_branch
      %58 = sbr.rel (0) target = $region69
    $region68: #{forward.1} parent=1 // pred_region
      _
    $region69: #{forward.1} parent=1 // pred_fallthru
      _
    %v60 = vld [vmem:[%s0] sm:$0xff]
    %v61 = vld [vmem:[%s0 + $0x8] sm:$0xff]
    %v62 = vld [vmem:[%s0 + $0x10] sm:$0xff]
    %v63 = vld [vmem:[%s0 + $0x18] sm:$0xff]
    %v64 = vld [vmem:[%s0 + $0x20] sm:$0xff]
    %v65 = vld [vmem:[%s0 + $0x28] sm:$0xff]
    %v66 = vld [vmem:[%s0 + $0x30] sm:$0xff]
    %v67 = vld [vmem:[%s0 + $0x38] sm:$0xff]
    %v68 = vld [vmem:[%s0 + $0x40] sm:$0xff]
    %v69 = vld [vmem:[%s0 + $0x48] sm:$0xff]
    %v70 = vld [vmem:[%s1] sm:$0xff]
    %v71 = vld [vmem:[%s1 + $0x8] sm:$0xf]
    %v72 = vld [vmem:[%s1 + $0xc] sm:$0xff]
    %v73 = vld [vmem:[%s1 + $0x14] sm:$0xf]
    %v74 = vld [vmem:[%s1 + $0x18] sm:$0xff]
    %v75 = vld [vmem:[%s1 + $0x20] sm:$0xf]
    %v76 = vld [vmem:[%s1 + $0x24] sm:$0xff]
    %v77 = vld [vmem:[%s1 + $0x2c] sm:$0xf]
    %v78 = vld [vmem:[%s1 + $0x30] sm:$0xff]
    %v79 = vld [vmem:[%s1 + $0x38] sm:$0xf]
    %v80 = vld [vmem:[%s1 + $0x3c] sm:$0xff]
    %v81 = vld [vmem:[%s1 + $0x44] sm:$0xf]
    %v82 = vld [vmem:[%s1 + $0x48] sm:$0xff]
    %v83 = vld [vmem:[%s1 + $0x50] sm:$0xf]
    %v84 = vld [vmem:[%s1 + $0x54] sm:$0xff]
    %v85 = vld [vmem:[%s1 + $0x5c] sm:$0xf]
    %v86 = vld [vmem:[%s1 + $0x60] sm:$0xff]
    %v87 = vld [vmem:[%s1 + $0x68] sm:$0xf]
    %v88 = vld [vmem:[%s1 + $0x6c] sm:$0xff]
    %v89 = vld [vmem:[%s1 + $0x74] sm:$0xf]
    %v90 = vld [vmem:[%s1 + $0x78] sm:$0xff]
    %v91 = vld [vmem:[%s1 + $0x80] sm:$0xf]
    %v92 = vld [vmem:[%s1 + $0x84] sm:$0xff]
    %v93 = vld [vmem:[%s1 + $0x8c] sm:$0xf]
    %v94 = vld [vmem:[%s1 + $0x90] sm:$0xff]
    %v95 = vld [vmem:[%s1 + $0x98] sm:$0xf]
    %v96 = vld [vmem:[%s1 + $0x9c] sm:$0xff]
    %v97 = vld [vmem:[%s1 + $0xa4] sm:$0xf]
    %v98 = vld [vmem:[%s1 + $0xa8] sm:$0xff]
    %v99 = vld [vmem:[%s1 + $0xb0] sm:$0xf]
    %v100 = vld [vmem:[%s1 + $0xb4] sm:$0xff]
    %v101 = vld [vmem:[%s1 + $0xbc] sm:$0xf]
    %v102 = vld [vmem:[%s1 + $0xc0] sm:$0xff]
    %v103 = vld [vmem:[%s1 + $0xc8] sm:$0xf]
    %v104 = vld [vmem:[%s1 + $0xcc] sm:$0x33]
    %v105 = vld [vmem:[%s1 + $0xd4] sm:$0x3]
    %v106 = vld [vmem:[%s2] sm:$0x7]
    %v108 = vperm.slane %v106, 0
    %v109 = vperm.slane %v106, 1
    %v110 = vperm.slane %v106, 2
    %v124 = vunpack.c.l.b16 %v60
    %v125 = vunpack.c.h.b16 %v60
    %v126 = vunpack.c.l.b16 %v61
    %v127 = vunpack.c.h.b16 %v61
    %v128 = vunpack.c.l.b16 %v62
    %v129 = vunpack.c.h.b16 %v62
    %v130 = vunpack.c.l.b16 %v63
    %v131 = vunpack.c.h.b16 %v63
    %v132 = vunpack.c.l.b16 %v64
    %v133 = vunpack.c.h.b16 %v64
    %v134 = vunpack.c.l.b16 %v65
    %v135 = vunpack.c.h.b16 %v65
    %v136 = vunpack.c.l.b16 %v66
    %v137 = vunpack.c.h.b16 %v66
    %v138 = vunpack.c.l.b16 %v67
    %v139 = vunpack.c.h.b16 %v67
    %v140 = vunpack.c.l.b16 %v68
    %v141 = vunpack.c.h.b16 %v68
    %v142 = vunpack.c.l.b16 %v69
    %v143 = vunpack.c.h.b16 %v69
    %v144 = vpack.c.b16 %v126, %v124
    %v145 = vpack.c.b16 %v127, %v125
    %v146 = vpack.c.b16 %v130, %v128
    %v147 = vpack.c.b16 %v131, %v129
    %v148 = vpack.c.b16 %v134, %v132
    %v149 = vpack.c.b16 %v135, %v133
    %v150 = vpack.c.b16 %v138, %v136
    %v151 = vpack.c.b16 %v139, %v137
    %v152 = vpack.c.b16 %v142, %v140
    %v153 = vpack.c.b16 %v143, %v141
    %v195 = vunpack.c.l.b16 %v70
    %v196 = vunpack.c.h.b16 %v70
    %v197 = vunpack.c.l.b16 %v71
    %v198 = vunpack.c.l.b16 %v72
    %v199 = vunpack.c.h.b16 %v72
    %v200 = vunpack.c.l.b16 %v73
    %v201 = vunpack.c.l.b16 %v74
    %v202 = vunpack.c.h.b16 %v74
    %v203 = vunpack.c.l.b16 %v75
    %v204 = vunpack.c.l.b16 %v76
    %v205 = vunpack.c.h.b16 %v76
    %v206 = vunpack.c.l.b16 %v77
    %v207 = vunpack.c.l.b16 %v78
    %v208 = vunpack.c.h.b16 %v78
    %v209 = vunpack.c.l.b16 %v79
    %v210 = vunpack.c.l.b16 %v80
    %v211 = vunpack.c.h.b16 %v80
    %v212 = vunpack.c.l.b16 %v81
    %v213 = vunpack.c.l.b16 %v82
    %v214 = vunpack.c.h.b16 %v82
    %v215 = vunpack.c.l.b16 %v83
    %v216 = vunpack.c.l.b16 %v84
    %v217 = vunpack.c.h.b16 %v84
    %v218 = vunpack.c.l.b16 %v85
    %v219 = vunpack.c.l.b16 %v86
    %v220 = vunpack.c.h.b16 %v86
    %v221 = vunpack.c.l.b16 %v87
    %v222 = vunpack.c.l.b16 %v88
    %v223 = vunpack.c.h.b16 %v88
    %v224 = vunpack.c.l.b16 %v89
    %v225 = vunpack.c.l.b16 %v90
    %v226 = vunpack.c.h.b16 %v90
    %v227 = vunpack.c.l.b16 %v91
    %v228 = vunpack.c.l.b16 %v92
    %v229 = vunpack.c.h.b16 %v92
    %v230 = vunpack.c.l.b16 %v93
    %v231 = vunpack.c.l.b16 %v94
    %v232 = vunpack.c.h.b16 %v94
    %v233 = vunpack.c.l.b16 %v95
    %v234 = vunpack.c.l.b16 %v96
    %v235 = vunpack.c.h.b16 %v96
    %v236 = vunpack.c.l.b16 %v97
    %v237 = vunpack.c.l.b16 %v98
    %v238 = vunpack.c.h.b16 %v98
    %v239 = vunpack.c.l.b16 %v99
    %v240 = vunpack.c.l.b16 %v100
    %v241 = vunpack.c.h.b16 %v100
    %v242 = vunpack.c.l.b16 %v101
    %v243 = vunpack.c.l.b16 %v102
    %v244 = vunpack.c.h.b16 %v102
    %v245 = vunpack.c.l.b16 %v103
    %v246 = vunpack.c.l.b16 %v104
    %v247 = vunpack.c.h.b16 %v104
    %v248 = vunpack.c.l.b16 %v105
    %v249 = vpack.c.b16 %v198, %v195
    %v250 = vpack.c.b16 %v199, %v196
    %v251 = vpack.c.b16 %v200, %v197
    %v252 = vpack.c.b16 %v204, %v201
    %v253 = vpack.c.b16 %v205, %v202
    %v254 = vpack.c.b16 %v206, %v203
    %v255 = vpack.c.b16 %v210, %v207
    %v256 = vpack.c.b16 %v211, %v208
    %v257 = vpack.c.b16 %v212, %v209
    %v258 = vpack.c.b16 %v216, %v213
    %v259 = vpack.c.b16 %v217, %v214
    %v260 = vpack.c.b16 %v218, %v215
    %v261 = vpack.c.b16 %v222, %v219
    %v262 = vpack.c.b16 %v223, %v220
    %v263 = vpack.c.b16 %v224, %v221
    %v264 = vpack.c.b16 %v228, %v225
    %v265 = vpack.c.b16 %v229, %v226
    %v266 = vpack.c.b16 %v230, %v227
    %v267 = vpack.c.b16 %v234, %v231
    %v268 = vpack.c.b16 %v235, %v232
    %v269 = vpack.c.b16 %v236, %v233
    %v270 = vpack.c.b16 %v240, %v237
    %v271 = vpack.c.b16 %v241, %v238
    %v272 = vpack.c.b16 %v242, %v239
    %v273 = vpack.c.b16 %v246, %v243
    %v274 = vpack.c.b16 %v247, %v244
    %v275 = vpack.c.b16 %v248, %v245
    %vm300 = vcmask 97280
    %v302 = vsel %vm300, %v145, 0
    %v305 = vsel %vm300, %v147, 0
    %v308 = vsel %vm300, %v149, 0
    %v311 = vsel %vm300, %v151, 0
    %v314 = vsel %vm300, %v153, 0
    %vm316 = vcmask 1045504
    %v318 = vsel %vm316, %v273, 0
    %v321 = vsel %vm316, %v274, 0
    %v324 = vsel %vm316, %v275, 0
    %326 = vmatpush.bf16.msra.mxu0 %v270
    %327 = vmatpush.bf16.msra.mxu0 %v267
    %328 = vmatpush.bf16.msra.mxu0 %v264
    %329 = vmatpush.bf16.msra.mxu0 %v261
    %330 = vmatpush.bf16.msra.mxu0 %v258
    %331 = vmatpush.bf16.msra.mxu0 %v255
    %332 = vmatpush.bf16.msra.mxu0 %v252
    %333 = vmatpush.bf16.msra.mxu0 %v249
    %334 = vmatmul.bf16.gmra.mxu0 %v144
    %v335 = vpop.f32.mrf.mxu0
    %v336 = vadd.f32 %v108, %v335
    %v337 = vpop.f32.mrf.mxu0
    %v338 = vadd.f32 %v108, %v337
    %339 = vmatmul.bf16.gmra.mxu0 %v146
    %v340 = vpop.f32.mrf.mxu0
    %v341 = vadd.f32 %v108, %v340
    %v342 = vpop.f32.mrf.mxu0
    %v343 = vadd.f32 %v108, %v342
    %344 = vmatmul.bf16.gmra.mxu0 %v148
    %v345 = vpop.f32.mrf.mxu0
    %v346 = vadd.f32 %v108, %v345
    %v347 = vpop.f32.mrf.mxu0
    %v348 = vadd.f32 %v108, %v347
    %349 = vmatmul.bf16.gmra.mxu0 %v150
    %v350 = vpop.f32.mrf.mxu0
    %v351 = vadd.f32 %v108, %v350
    %v352 = vpop.f32.mrf.mxu0
    %v353 = vadd.f32 %v108, %v352
    %354 = vmatmul.bf16.gmra.mxu0 %v152
    %v355 = vpop.f32.mrf.mxu0
    %v356 = vadd.f32 %v108, %v355
    %v357 = vpop.f32.mrf.mxu0
    %v358 = vadd.f32 %v108, %v357
    %359 = vdwg.mxu0
    %360 = vmatpush.bf16.msra.mxu0 0
    %361 = vmatpush.bf16.msra.mxu0 0
    %362 = vmatpush.bf16.msra.mxu0 0
    %363 = vmatpush.bf16.msra.mxu0 0
    %364 = vmatpush.bf16.msra.mxu0 0
    %365 = vmatpush.bf16.msra.mxu0 0
    %366 = vmatpush.bf16.msra.mxu0 0
    %367 = vmatpush.bf16.msra.mxu0 %v318
    %368 = vmatmul.bf16.gmra.mxu0 %v302
    %v369 = vpop.f32.mrf.mxu0
    %v370 = vadd.f32 %v336, %v369
    %v371 = vpop.f32.mrf.mxu0
    %v372 = vadd.f32 %v338, %v371
    %373 = vmatmul.bf16.gmra.mxu0 %v305
    %v374 = vpop.f32.mrf.mxu0
    %v375 = vadd.f32 %v341, %v374
    %v376 = vpop.f32.mrf.mxu0
    %v377 = vadd.f32 %v343, %v376
    %378 = vmatmul.bf16.gmra.mxu0 %v308
    %v379 = vpop.f32.mrf.mxu0
    %v380 = vadd.f32 %v346, %v379
    %v381 = vpop.f32.mrf.mxu0
    %v382 = vadd.f32 %v348, %v381
    %383 = vmatmul.bf16.gmra.mxu0 %v311
    %v384 = vpop.f32.mrf.mxu0
    %v385 = vadd.f32 %v351, %v384
    %v386 = vpop.f32.mrf.mxu0
    %v387 = vadd.f32 %v353, %v386
    %388 = vmatmul.bf16.gmra.mxu0 %v314
    %v389 = vpop.f32.mrf.mxu0
    %v390 = vadd.f32 %v356, %v389
    %v391 = vpop.f32.mrf.mxu0
    %v392 = vadd.f32 %v358, %v391
    %393 = vdwg.mxu0
    %394 = vmatpush.bf16.msra.mxu0 %v271
    %395 = vmatpush.bf16.msra.mxu0 %v268
    %396 = vmatpush.bf16.msra.mxu0 %v265
    %397 = vmatpush.bf16.msra.mxu0 %v262
    %398 = vmatpush.bf16.msra.mxu0 %v259
    %399 = vmatpush.bf16.msra.mxu0 %v256
    %400 = vmatpush.bf16.msra.mxu0 %v253
    %401 = vmatpush.bf16.msra.mxu0 %v250
    %402 = vmatmul.bf16.gmra.mxu0 %v144
    %v403 = vpop.f32.mrf.mxu0
    %v404 = vadd.f32 %v109, %v403
    %v405 = vpop.f32.mrf.mxu0
    %v406 = vadd.f32 %v109, %v405
    %407 = vmatmul.bf16.gmra.mxu0 %v146
    %v408 = vpop.f32.mrf.mxu0
    %v409 = vadd.f32 %v109, %v408
    %v410 = vpop.f32.mrf.mxu0
    %v411 = vadd.f32 %v109, %v410
    %412 = vmatmul.bf16.gmra.mxu0 %v148
    %v413 = vpop.f32.mrf.mxu0
    %v414 = vadd.f32 %v109, %v413
    %v415 = vpop.f32.mrf.mxu0
    %v416 = vadd.f32 %v109, %v415
    %417 = vmatmul.bf16.gmra.mxu0 %v150
    %v418 = vpop.f32.mrf.mxu0
    %v419 = vadd.f32 %v109, %v418
    %v420 = vpop.f32.mrf.mxu0
    %v421 = vadd.f32 %v109, %v420
    %422 = vmatmul.bf16.gmra.mxu0 %v152
    %v423 = vpop.f32.mrf.mxu0
    %v424 = vadd.f32 %v109, %v423
    %v425 = vpop.f32.mrf.mxu0
    %v426 = vadd.f32 %v109, %v425
    %427 = vdwg.mxu0
    %428 = vmatpush.bf16.msra.mxu0 0
    %429 = vmatpush.bf16.msra.mxu0 0
    %430 = vmatpush.bf16.msra.mxu0 0
    %431 = vmatpush.bf16.msra.mxu0 0
    %432 = vmatpush.bf16.msra.mxu0 0
    %433 = vmatpush.bf16.msra.mxu0 0
    %434 = vmatpush.bf16.msra.mxu0 0
    %435 = vmatpush.bf16.msra.mxu0 %v321
    %436 = vmatmul.bf16.gmra.mxu0 %v302
    %v437 = vpop.f32.mrf.mxu0
    %v438 = vadd.f32 %v404, %v437
    %v439 = vpop.f32.mrf.mxu0
    %v440 = vadd.f32 %v406, %v439
    %441 = vmatmul.bf16.gmra.mxu0 %v305
    %v442 = vpop.f32.mrf.mxu0
    %v443 = vadd.f32 %v409, %v442
    %v444 = vpop.f32.mrf.mxu0
    %v445 = vadd.f32 %v411, %v444
    %446 = vmatmul.bf16.gmra.mxu0 %v308
    %v447 = vpop.f32.mrf.mxu0
    %v448 = vadd.f32 %v414, %v447
    %v449 = vpop.f32.mrf.mxu0
    %v450 = vadd.f32 %v416, %v449
    %451 = vmatmul.bf16.gmra.mxu0 %v311
    %v452 = vpop.f32.mrf.mxu0
    %v453 = vadd.f32 %v419, %v452
    %v454 = vpop.f32.mrf.mxu0
    %v455 = vadd.f32 %v421, %v454
    %456 = vmatmul.bf16.gmra.mxu0 %v314
    %v457 = vpop.f32.mrf.mxu0
    %v458 = vadd.f32 %v424, %v457
    %v459 = vpop.f32.mrf.mxu0
    %v460 = vadd.f32 %v426, %v459
    %461 = vdwg.mxu0
    %462 = vmatpush.bf16.msra.mxu0 %v272
    %463 = vmatpush.bf16.msra.mxu0 %v269
    %464 = vmatpush.bf16.msra.mxu0 %v266
    %465 = vmatpush.bf16.msra.mxu0 %v263
    %466 = vmatpush.bf16.msra.mxu0 %v260
    %467 = vmatpush.bf16.msra.mxu0 %v257
    %468 = vmatpush.bf16.msra.mxu0 %v254
    %469 = vmatpush.bf16.msra.mxu0 %v251
    %470 = vmatmul.bf16.gmra.mxu0 %v144
    %v471 = vpop.f32.mrf.mxu0
    %v472 = vadd.f32 %v110, %v471
    %v473 = vpop.f32.mrf.mxu0
    %v474 = vadd.f32 %v110, %v473
    %475 = vmatmul.bf16.gmra.mxu0 %v146
    %v476 = vpop.f32.mrf.mxu0
    %v477 = vadd.f32 %v110, %v476
    %v478 = vpop.f32.mrf.mxu0
    %v479 = vadd.f32 %v110, %v478
    %480 = vmatmul.bf16.gmra.mxu0 %v148
    %v481 = vpop.f32.mrf.mxu0
    %v482 = vadd.f32 %v110, %v481
    %v483 = vpop.f32.mrf.mxu0
    %v484 = vadd.f32 %v110, %v483
    %485 = vmatmul.bf16.gmra.mxu0 %v150
    %v486 = vpop.f32.mrf.mxu0
    %v487 = vadd.f32 %v110, %v486
    %v488 = vpop.f32.mrf.mxu0
    %v489 = vadd.f32 %v110, %v488
    %490 = vmatmul.bf16.gmra.mxu0 %v152
    %v491 = vpop.f32.mrf.mxu0
    %v492 = vadd.f32 %v110, %v491
    %v493 = vpop.f32.mrf.mxu0
    %v494 = vadd.f32 %v110, %v493
    %495 = vdwg.mxu0
    %496 = vmatpush.bf16.msra.mxu0 0
    %497 = vmatpush.bf16.msra.mxu0 0
    %498 = vmatpush.bf16.msra.mxu0 0
    %499 = vmatpush.bf16.msra.mxu0 0
    %500 = vmatpush.bf16.msra.mxu0 0
    %501 = vmatpush.bf16.msra.mxu0 0
    %502 = vmatpush.bf16.msra.mxu0 0
    %503 = vmatpush.bf16.msra.mxu0 %v324
    %504 = vmatmul.bf16.gmra.mxu0 %v302
    %v505 = vpop.f32.mrf.mxu0
    %v506 = vadd.f32 %v472, %v505
    %v507 = vpop.f32.mrf.mxu0
    %v508 = vadd.f32 %v474, %v507
    %509 = vmatmul.bf16.gmra.mxu0 %v305
    %v510 = vpop.f32.mrf.mxu0
    %v511 = vadd.f32 %v477, %v510
    %v512 = vpop.f32.mrf.mxu0
    %v513 = vadd.f32 %v479, %v512
    %514 = vmatmul.bf16.gmra.mxu0 %v308
    %v515 = vpop.f32.mrf.mxu0
    %v516 = vadd.f32 %v482, %v515
    %v517 = vpop.f32.mrf.mxu0
    %v518 = vadd.f32 %v484, %v517
    %519 = vmatmul.bf16.gmra.mxu0 %v311
    %v520 = vpop.f32.mrf.mxu0
    %v521 = vadd.f32 %v487, %v520
    %v522 = vpop.f32.mrf.mxu0
    %v523 = vadd.f32 %v489, %v522
    %524 = vmatmul.bf16.gmra.mxu0 %v314
    %v525 = vpop.f32.mrf.mxu0
    %v526 = vadd.f32 %v492, %v525
    %v527 = vpop.f32.mrf.mxu0
    %v528 = vadd.f32 %v494, %v527
    %529 = vdwg.mxu0
    %v530 = vadd.f32 %v370, %v372
    %v531 = vadd.f32 %v530, %v375
    %v532 = vadd.f32 %v531, %v377
    %v533 = vadd.f32 %v532, %v380
    %v534 = vadd.f32 %v533, %v382
    %v535 = vadd.f32 %v534, %v385
    %v536 = vadd.f32 %v535, %v387
    %v537 = vadd.f32 %v536, %v390
    %v538 = vadd.f32 %v537, %v392
    %v539 = vrot.slane %v538, 4
    %v540 = vadd.f32 %v538, %v539
    %v541 = vrot.slane %v540, 2
    %v542 = vadd.f32 %v540, %v541
    %v543 = vrot.slane %v542, 1
    %v544 = vadd.f32 %v542, %v543
    %v545 = vadd.f32 %v438, %v440
    %v546 = vadd.f32 %v545, %v443
    %v547 = vadd.f32 %v546, %v445
    %v548 = vadd.f32 %v547, %v448
    %v549 = vadd.f32 %v548, %v450
    %v550 = vadd.f32 %v549, %v453
    %v551 = vadd.f32 %v550, %v455
    %v552 = vadd.f32 %v551, %v458
    %v553 = vadd.f32 %v552, %v460
    %v554 = vrot.slane %v553, 4
    %v555 = vadd.f32 %v553, %v554
    %v556 = vrot.slane %v555, 2
    %v557 = vadd.f32 %v555, %v556
    %v558 = vrot.slane %v557, 1
    %v559 = vadd.f32 %v557, %v558
    %vm560 = vcmask 523264
    %v561 = vsel %vm560, %v506, 0.0
    %v562 = vsel %vm560, %v508, 0.0
    %v563 = vadd.f32 %v561, %v562
    %v564 = vsel %vm560, %v511, 0.0
    %v565 = vadd.f32 %v563, %v564
    %v566 = vsel %vm560, %v513, 0.0
    %v567 = vadd.f32 %v565, %v566
    %v568 = vsel %vm560, %v516, 0.0
    %v569 = vadd.f32 %v567, %v568
    %v570 = vsel %vm560, %v518, 0.0
    %v571 = vadd.f32 %v569, %v570
    %v572 = vsel %vm560, %v521, 0.0
    %v573 = vadd.f32 %v571, %v572
    %v574 = vsel %vm560, %v523, 0.0
    %v575 = vadd.f32 %v573, %v574
    %v576 = vsel %vm560, %v526, 0.0
    %v577 = vadd.f32 %v575, %v576
    %v578 = vsel %vm560, %v528, 0.0
    %v579 = vadd.f32 %v577, %v578
    %v580 = vrot.slane %v579, 4
    %v581 = vadd.f32 %v579, %v580
    %v582 = vrot.slane %v581, 2
    %v583 = vadd.f32 %v581, %v582
    %v584 = vrot.slane %v583, 1
    %v585 = vadd.f32 %v583, %v584
    %v586 = vmul.f32 %v370, %v370
    %v587 = vmul.f32 %v438, %v438
    %v588 = vmul.f32 %v506, %v506
    %v589 = vmul.f32 %v372, %v372
    %v590 = vmul.f32 %v440, %v440
    %v591 = vmul.f32 %v508, %v508
    %v592 = vmul.f32 %v375, %v375
    %v593 = vmul.f32 %v443, %v443
    %v594 = vmul.f32 %v511, %v511
    %v595 = vmul.f32 %v377, %v377
    %v596 = vmul.f32 %v445, %v445
    %v597 = vmul.f32 %v513, %v513
    %v598 = vmul.f32 %v380, %v380
    %v599 = vmul.f32 %v448, %v448
    %v600 = vmul.f32 %v516, %v516
    %v601 = vmul.f32 %v382, %v382
    %v602 = vmul.f32 %v450, %v450
    %v603 = vmul.f32 %v518, %v518
    %v604 = vmul.f32 %v385, %v385
    %v605 = vmul.f32 %v453, %v453
    %v606 = vmul.f32 %v521, %v521
    %v607 = vmul.f32 %v387, %v387
    %v608 = vmul.f32 %v455, %v455
    %v609 = vmul.f32 %v523, %v523
    %v610 = vmul.f32 %v390, %v390
    %v611 = vmul.f32 %v458, %v458
    %v612 = vmul.f32 %v526, %v526
    %v613 = vmul.f32 %v392, %v392
    %v614 = vmul.f32 %v460, %v460
    %v615 = vmul.f32 %v528, %v528
    %v616 = vadd.f32 %v586, %v589
    %v617 = vadd.f32 %v616, %v592
    %v618 = vadd.f32 %v617, %v595
    %v619 = vadd.f32 %v618, %v598
    %v620 = vadd.f32 %v619, %v601
    %v621 = vadd.f32 %v620, %v604
    %v622 = vadd.f32 %v621, %v607
    %v623 = vadd.f32 %v622, %v610
    %v624 = vadd.f32 %v623, %v613
    %v625 = vrot.slane %v624, 4
    %v626 = vadd.f32 %v624, %v625
    %v627 = vrot.slane %v626, 2
    %v628 = vadd.f32 %v626, %v627
    %v629 = vrot.slane %v628, 1
    %v630 = vadd.f32 %v628, %v629
    %v631 = vadd.f32 %v587, %v590
    %v632 = vadd.f32 %v631, %v593
    %v633 = vadd.f32 %v632, %v596
    %v634 = vadd.f32 %v633, %v599
    %v635 = vadd.f32 %v634, %v602
    %v636 = vadd.f32 %v635, %v605
    %v637 = vadd.f32 %v636, %v608
    %v638 = vadd.f32 %v637, %v611
    %v639 = vadd.f32 %v638, %v614
    %v640 = vrot.slane %v639, 4
    %v641 = vadd.f32 %v639, %v640
    %v642 = vrot.slane %v641, 2
    %v643 = vadd.f32 %v641, %v642
    %v644 = vrot.slane %v643, 1
    %v645 = vadd.f32 %v643, %v644
    %v646 = vsel %vm560, %v588, 0.0
    %v647 = vsel %vm560, %v591, 0.0
    %v648 = vadd.f32 %v646, %v647
    %v649 = vsel %vm560, %v594, 0.0
    %v650 = vadd.f32 %v648, %v649
    %v651 = vsel %vm560, %v597, 0.0
    %v652 = vadd.f32 %v650, %v651
    %v653 = vsel %vm560, %v600, 0.0
    %v654 = vadd.f32 %v652, %v653
    %v655 = vsel %vm560, %v603, 0.0
    %v656 = vadd.f32 %v654, %v655
    %v657 = vsel %vm560, %v606, 0.0
    %v658 = vadd.f32 %v656, %v657
    %v659 = vsel %vm560, %v609, 0.0
    %v660 = vadd.f32 %v658, %v659
    %v661 = vsel %vm560, %v612, 0.0
    %v662 = vadd.f32 %v660, %v661
    %v663 = vsel %vm560, %v615, 0.0
    %v664 = vadd.f32 %v662, %v663
    %v665 = vrot.slane %v664, 4
    %v666 = vadd.f32 %v664, %v665
    %v667 = vrot.slane %v666, 2
    %v668 = vadd.f32 %v666, %v667
    %v669 = vrot.slane %v668, 1
    %v670 = vadd.f32 %v668, %v669
    %672 = vrot.lane.b32.xlu0 %v544, 96
    %v673 = vpop.permute.xlu0 %672
    %v675 = vadd.f32 %v544, %v673
    %677 = vrot.lane.b32.xlu0 %v630, 96
    %v678 = vpop.permute.xlu0 %677
    %v680 = vadd.f32 %v630, %v678
    %681 = vrot.lane.b32.xlu0 %v544, 64
    %v682 = vpop.permute.xlu0 %681
    %v684 = vadd.f32 %v675, %v682
    %685 = vrot.lane.b32.xlu0 %v630, 64
    %v686 = vpop.permute.xlu0 %685
    %v688 = vadd.f32 %v680, %v686
    %689 = vrot.lane.b32.xlu0 %v544, 32
    %v690 = vpop.permute.xlu0 %689
    %v692 = vadd.f32 %v684, %v690
    %693 = vrot.lane.b32.xlu0 %v630, 32
    %v694 = vpop.permute.xlu0 %693
    %v696 = vadd.f32 %v688, %v694
    %v697 = vadd.f32 %v692, %v559
    %v698 = vadd.f32 %v696, %v645
    %700 = vrot.lane.b32.xlu0 %v559, 96
    %v701 = vpop.permute.xlu0 %700
    %v703 = vadd.f32 %v697, %v701
    %705 = vrot.lane.b32.xlu0 %v645, 96
    %v706 = vpop.permute.xlu0 %705
    %v708 = vadd.f32 %v698, %v706
    %709 = vrot.lane.b32.xlu0 %v559, 64
    %v710 = vpop.permute.xlu0 %709
    %v712 = vadd.f32 %v703, %v710
    %713 = vrot.lane.b32.xlu0 %v645, 64
    %v714 = vpop.permute.xlu0 %713
    %v716 = vadd.f32 %v708, %v714
    %717 = vrot.lane.b32.xlu0 %v559, 32
    %v718 = vpop.permute.xlu0 %717
    %v720 = vadd.f32 %v712, %v718
    %721 = vrot.lane.b32.xlu0 %v645, 32
    %v722 = vpop.permute.xlu0 %721
    %v724 = vadd.f32 %v716, %v722
    %v725 = vadd.f32 %v720, %v585
    %v726 = vadd.f32 %v724, %v670
    %728 = vrot.lane.b32.xlu0 %v585, 96
    %v729 = vpop.permute.xlu0 %728
    %v731 = vadd.f32 %v725, %v729
    %733 = vrot.lane.b32.xlu0 %v670, 96
    %v734 = vpop.permute.xlu0 %733
    %v736 = vadd.f32 %v726, %v734
    %v737 = vmul.f32 %v731, 0.00125
    %v738 = vmul.f32 %v736, 0.00125
    %v739 = vmul.f32 %v737, %v737
    %v740 = vsub.f32 %v738, %v739
    %v741 = vmax.f32 %v740, 0.0
    %v742 = vadd.f32 %v741, 1e-05
    %v743 = vrsqrt.pop %v742
    %v744 = vmul.f32 %v743, %v742
    %v745 = vmul.f32 %v744, %v743
    %v746 = vmul.f32 0.5, %v745
    %v747 = vsub.f32 1.5, %v746
    %v748 = vmul.f32 %v743, %v747
    %vm749 = vweird.f32 %v742
    %vm750 = vweird.f32 %v743
    %vm751 = vmor %vm749, %vm750
    %v752 = vsel %vm751, %v743, %v748
    %v753 = vld [vmem:[%s3] sm:$0x1]
    %v754 = vmul.f32 %v752, %v753
    %v755 = vld [vmem:[%s4] sm:$0x1]
    %v756 = vmul.f32 %v737, %v754
    %v757 = vsub.f32 %v755, %v756
    %759 = vrot.lane.b32.xlu0 %v754, 32
    %v760 = vpop.permute.xlu0 %759
    %762 = vrot.lane.b32.xlu0 %v754, 64
    %v763 = vpop.permute.xlu0 %762
    %765 = vrot.lane.b32.xlu0 %v754, 96
    %v766 = vpop.permute.xlu0 %765
    %vm768 = vcmask 261120
    %v769 = vsel %vm768, %v754, %v760
    %v770 = vsel %vm560, %v769, %v763
    %vm771 = vcmask 785408
    %v772 = vsel %vm771, %v770, %v766
    %v774 = vperm.slane %v757, 0
    %775 = vrot.lane.b32.xlu0 %v774, 32
    %v776 = vpop.permute.xlu0 %775
    %778 = vrot.lane.b32.xlu0 %v774, 64
    %v779 = vpop.permute.xlu0 %778
    %781 = vrot.lane.b32.xlu0 %v774, 96
    %v782 = vpop.permute.xlu0 %781
    %v784 = vsel %vm768, %v757, %v776
    %v785 = vsel %vm560, %v784, %v779
    %v786 = vsel %vm771, %v785, %v782
    %v787 = vperm.slane %v772, 0
    %v788 = vperm.slane %v769, 0
    %v789 = vmul.f32 %v370, %v787
    %v790 = vmul.f32 %v438, %v787
    %v791 = vmul.f32 %v506, %v788
    %v792 = vmul.f32 %v372, %v787
    %v793 = vmul.f32 %v440, %v787
    %v794 = vmul.f32 %v508, %v788
    %v795 = vmul.f32 %v375, %v787
    %v796 = vmul.f32 %v443, %v787
    %v797 = vmul.f32 %v511, %v788
    %v798 = vmul.f32 %v377, %v787
    %v799 = vmul.f32 %v445, %v787
    %v800 = vmul.f32 %v513, %v788
    %v801 = vmul.f32 %v380, %v787
    %v802 = vmul.f32 %v448, %v787
    %v803 = vmul.f32 %v516, %v788
    %v804 = vmul.f32 %v382, %v787
    %v805 = vmul.f32 %v450, %v787
    %v806 = vmul.f32 %v518, %v788
    %v807 = vmul.f32 %v385, %v787
    %v808 = vmul.f32 %v453, %v787
    %v809 = vmul.f32 %v521, %v788
    %v810 = vmul.f32 %v387, %v787
    %v811 = vmul.f32 %v455, %v787
    %v812 = vmul.f32 %v523, %v788
    %v813 = vmul.f32 %v390, %v787
    %v814 = vmul.f32 %v458, %v787
    %v815 = vmul.f32 %v526, %v788
    %v816 = vmul.f32 %v392, %v787
    %v817 = vmul.f32 %v460, %v787
    %v818 = vmul.f32 %v528, %v788
    %v819 = vperm.slane %v786, 0
    %v820 = vperm.slane %v784, 0
    %v821 = vadd.f32 %v789, %v819
    %v822 = vadd.f32 %v790, %v819
    %v823 = vadd.f32 %v791, %v820
    %v824 = vadd.f32 %v792, %v819
    %v825 = vadd.f32 %v793, %v819
    %v826 = vadd.f32 %v794, %v820
    %v827 = vadd.f32 %v795, %v819
    %v828 = vadd.f32 %v796, %v819
    %v829 = vadd.f32 %v797, %v820
    %v830 = vadd.f32 %v798, %v819
    %v831 = vadd.f32 %v799, %v819
    %v832 = vadd.f32 %v800, %v820
    %v833 = vadd.f32 %v801, %v819
    %v834 = vadd.f32 %v802, %v819
    %v835 = vadd.f32 %v803, %v820
    %v836 = vadd.f32 %v804, %v819
    %v837 = vadd.f32 %v805, %v819
    %v838 = vadd.f32 %v806, %v820
    %v839 = vadd.f32 %v807, %v819
    %v840 = vadd.f32 %v808, %v819
    %v841 = vadd.f32 %v809, %v820
    %v842 = vadd.f32 %v810, %v819
    %v843 = vadd.f32 %v811, %v819
    %v844 = vadd.f32 %v812, %v820
    %v845 = vadd.f32 %v813, %v819
    %v846 = vadd.f32 %v814, %v819
    %v847 = vadd.f32 %v815, %v820
    %v848 = vadd.f32 %v816, %v819
    %v849 = vadd.f32 %v817, %v819
    %v850 = vadd.f32 %v818, %v820
    %v851 = vmax.f32 %v821, 0.0
    %v852 = vmax.f32 %v822, 0.0
    %v853 = vmax.f32 %v823, 0.0
    %v854 = vmax.f32 %v824, 0.0
    %v855 = vmax.f32 %v825, 0.0
    %v856 = vmax.f32 %v826, 0.0
    %v857 = vmax.f32 %v827, 0.0
    %v858 = vmax.f32 %v828, 0.0
    %v859 = vmax.f32 %v829, 0.0
    %v860 = vmax.f32 %v830, 0.0
    %v861 = vmax.f32 %v831, 0.0
    %v862 = vmax.f32 %v832, 0.0
    %v863 = vmax.f32 %v833, 0.0
    %v864 = vmax.f32 %v834, 0.0
    %v865 = vmax.f32 %v835, 0.0
    %v866 = vmax.f32 %v836, 0.0
    %v867 = vmax.f32 %v837, 0.0
    %v868 = vmax.f32 %v838, 0.0
    %v869 = vmax.f32 %v839, 0.0
    %v870 = vmax.f32 %v840, 0.0
    %v871 = vmax.f32 %v841, 0.0
    %v872 = vmax.f32 %v842, 0.0
    %v873 = vmax.f32 %v843, 0.0
    %v874 = vmax.f32 %v844, 0.0
    %v875 = vmax.f32 %v845, 0.0
    %v876 = vmax.f32 %v846, 0.0
    %v877 = vmax.f32 %v847, 0.0
    %v878 = vmax.f32 %v848, 0.0
    %v879 = vmax.f32 %v849, 0.0
    %v880 = vmax.f32 %v850, 0.0
    %v881 = vmax.f32 %v851, %v866
    %v882 = vmax.f32 %v852, %v867
    %v883 = vmax.f32 %v854, %v869
    %v884 = vmax.f32 %v855, %v870
    %v885 = vmax.f32 %v857, %v872
    %v886 = vmax.f32 %v858, %v873
    %v887 = vmax.f32 %v860, %v875
    %v888 = vmax.f32 %v861, %v876
    %v889 = vmax.f32 %v863, %v878
    %v890 = vmax.f32 %v864, %v879
    %v891 = vmax.f32 %v853, %v868
    %v892 = vmax.f32 %v856, %v871
    %v893 = vmax.f32 %v859, %v874
    %v894 = vmax.f32 %v862, %v877
    %v895 = vmax.f32 %v865, %v880
    %906 = vrot.lane.b32.xlu0 %v882, 96
    %v907 = vpop.permute.xlu0 %906
    %908 = vrot.lane.b32.xlu0 %v891, 96
    %v909 = vpop.permute.xlu0 %908
    %910 = vrot.lane.b32.xlu0 %v884, 96
    %v911 = vpop.permute.xlu0 %910
    %912 = vrot.lane.b32.xlu0 %v892, 96
    %v913 = vpop.permute.xlu0 %912
    %914 = vrot.lane.b32.xlu0 %v886, 96
    %v915 = vpop.permute.xlu0 %914
    %916 = vrot.lane.b32.xlu0 %v893, 96
    %v917 = vpop.permute.xlu0 %916
    %918 = vrot.lane.b32.xlu0 %v888, 96
    %v919 = vpop.permute.xlu0 %918
    %920 = vrot.lane.b32.xlu0 %v894, 96
    %v921 = vpop.permute.xlu0 %920
    %922 = vrot.lane.b32.xlu0 %v890, 96
    %v923 = vpop.permute.xlu0 %922
    %924 = vrot.lane.b32.xlu0 %v895, 96
    %v925 = vpop.permute.xlu0 %924
    %v926 = vsel %vm771, %v907, %v909
    %v927 = vsel %vm771, %v911, %v913
    %v928 = vsel %vm771, %v915, %v917
    %v929 = vsel %vm771, %v919, %v921
    %v930 = vsel %vm771, %v923, %v925
    %v941 = vmax.f32 %v881, %v926
    %v942 = vmax.f32 %v882, %v909
    %v943 = vmax.f32 %v883, %v927
    %v944 = vmax.f32 %v884, %v913
    %v945 = vmax.f32 %v885, %v928
    %v946 = vmax.f32 %v886, %v917
    %v947 = vmax.f32 %v887, %v929
    %v948 = vmax.f32 %v888, %v921
    %v949 = vmax.f32 %v889, %v930
    %v950 = vmax.f32 %v890, %v925
    %961 = vrot.lane.b32.xlu0 %v941, 32
    %v962 = vpop.permute.xlu0 %961
    %963 = vrot.lane.b32.xlu0 %v942, 32
    %v964 = vpop.permute.xlu0 %963
    %965 = vrot.lane.b32.xlu0 %v943, 32
    %v966 = vpop.permute.xlu0 %965
    %967 = vrot.lane.b32.xlu0 %v944, 32
    %v968 = vpop.permute.xlu0 %967
    %969 = vrot.lane.b32.xlu0 %v945, 32
    %v970 = vpop.permute.xlu0 %969
    %971 = vrot.lane.b32.xlu0 %v946, 32
    %v972 = vpop.permute.xlu0 %971
    %973 = vrot.lane.b32.xlu0 %v947, 32
    %v974 = vpop.permute.xlu0 %973
    %975 = vrot.lane.b32.xlu0 %v948, 32
    %v976 = vpop.permute.xlu0 %975
    %977 = vrot.lane.b32.xlu0 %v949, 32
    %v978 = vpop.permute.xlu0 %977
    %979 = vrot.lane.b32.xlu0 %v950, 32
    %v980 = vpop.permute.xlu0 %979
    %v981 = vsel %vm768, %v962, %v964
    %v982 = vsel %vm768, %v966, %v968
    %v983 = vsel %vm768, %v970, %v972
    %v984 = vsel %vm768, %v974, %v976
    %v985 = vsel %vm768, %v978, %v980
    %v996 = vsel %vm768, 0.0, %v962
    %v997 = vsel %vm768, 0.0, %v966
    %v998 = vsel %vm768, 0.0, %v970
    %v999 = vsel %vm768, 0.0, %v974
    %v1000 = vsel %vm768, 0.0, %v978
    %v1001 = vsel %vm560, %v981, 0.0
    %v1002 = vsel %vm560, %v982, 0.0
    %v1003 = vsel %vm560, %v983, 0.0
    %v1004 = vsel %vm560, %v984, 0.0
    %v1005 = vsel %vm560, %v985, 0.0
    %1014 = vrot.lane.b32.xlu0 %v996, 96
    %v1015 = vpop.permute.xlu0 %1014
    %1016 = vrot.lane.b32.xlu0 %v1001, 96
    %v1017 = vpop.permute.xlu0 %1016
    %1018 = vrot.lane.b32.xlu0 %v997, 96
    %v1019 = vpop.permute.xlu0 %1018
    %1020 = vrot.lane.b32.xlu0 %v1002, 96
    %v1021 = vpop.permute.xlu0 %1020
    %1022 = vrot.lane.b32.xlu0 %v998, 96
    %v1023 = vpop.permute.xlu0 %1022
    %1024 = vrot.lane.b32.xlu0 %v1003, 96
    %v1025 = vpop.permute.xlu0 %1024
    %1026 = vrot.lane.b32.xlu0 %v999, 96
    %v1027 = vpop.permute.xlu0 %1026
    %1028 = vrot.lane.b32.xlu0 %v1004, 96
    %v1029 = vpop.permute.xlu0 %1028
    %v1030 = vsel %vm771, %v1015, %v1017
    %v1031 = vsel %vm771, %v1019, %v1021
    %v1032 = vsel %vm771, %v1023, %v1025
    %v1033 = vsel %vm771, %v1027, %v1029
    %1048 = vrot.lane.b32.xlu0 %v997, 64
    %v1049 = vpop.permute.xlu0 %1048
    %1050 = vrot.lane.b32.xlu0 %v1002, 64
    %v1051 = vpop.permute.xlu0 %1050
    %1052 = vrot.lane.b32.xlu0 %v998, 64
    %v1053 = vpop.permute.xlu0 %1052
    %1054 = vrot.lane.b32.xlu0 %v1003, 64
    %v1055 = vpop.permute.xlu0 %1054
    %1056 = vrot.lane.b32.xlu0 %v999, 64
    %v1057 = vpop.permute.xlu0 %1056
    %1058 = vrot.lane.b32.xlu0 %v1004, 64
    %v1059 = vpop.permute.xlu0 %1058
    %1060 = vrot.lane.b32.xlu0 %v1000, 64
    %v1061 = vpop.permute.xlu0 %1060
    %1062 = vrot.lane.b32.xlu0 %v1005, 64
    %v1063 = vpop.permute.xlu0 %1062
    %v1064 = vsel %vm560, %v1049, %v1051
    %v1065 = vsel %vm560, %v1053, %v1055
    %v1066 = vsel %vm560, %v1057, %v1059
    %v1067 = vsel %vm560, %v1061, %v1063
    %1081 = vrot.lane.b32.xlu0 %v998, 32
    %v1082 = vpop.permute.xlu0 %1081
    %1083 = vrot.lane.b32.xlu0 %v1003, 32
    %v1084 = vpop.permute.xlu0 %1083
    %1085 = vrot.lane.b32.xlu0 %v999, 32
    %v1086 = vpop.permute.xlu0 %1085
    %1087 = vrot.lane.b32.xlu0 %v1004, 32
    %v1088 = vpop.permute.xlu0 %1087
    %1089 = vrot.lane.b32.xlu0 %v1000, 32
    %v1090 = vpop.permute.xlu0 %1089
    %1091 = vrot.lane.b32.xlu0 %v1005, 32
    %v1092 = vpop.permute.xlu0 %1091
    %1093 = vrot.lane.b32.xlu0 0.0, 32
    %v1094 = vpop.permute.xlu0 %1093
    %v1095 = vsel %vm768, %v1082, %v1084
    %v1096 = vsel %vm768, %v1086, %v1088
    %v1097 = vsel %vm768, %v1090, %v1092
    %v1105 = vsel %vm771, 0.0, %v1015
    %v1106 = vsel %vm771, %v1001, %v1019
    %v1107 = vsel %vm771, %v1002, %v1023
    %v1108 = vsel %vm771, %v1003, %v1027
    %v1109 = vsel %vm560, %v1017, %v1049
    %v1110 = vsel %vm560, %v1021, %v1053
    %v1111 = vsel %vm560, %v1025, %v1057
    %v1112 = vsel %vm560, %v1029, %v1061
    %v1113 = vsel %vm768, %v1051, %v1082
    %v1114 = vsel %vm768, %v1055, %v1086
    %v1115 = vsel %vm768, %v1059, %v1090
    %v1116 = vsel %vm768, %v1063, %v1094
    %v1117 = vpack.c.bf16 %v996, 0.0
    %v1118 = vpack.c.bf16 %v1106, %v1105
    %v1119 = vpack.c.bf16 %v1031, %v1030
    %v1120 = vpack.c.bf16 %v1110, %v1109
    %v1121 = vpack.c.bf16 %v1065, %v1064
    %v1122 = vpack.c.bf16 %v1114, %v1113
    %v1123 = vpack.c.bf16 %v1096, %v1095
    %v1124 = vpack.c.bf16 %v998, %v997
    %v1125 = vpack.c.bf16 %v1108, %v1107
    %v1126 = vpack.c.bf16 %v1033, %v1032
    %v1127 = vpack.c.bf16 %v1112, %v1111
    %v1128 = vpack.c.bf16 %v1067, %v1066
    %v1129 = vpack.c.bf16 %v1116, %v1115
    %v1130 = vpack.c.bf16 %v1094, %v1097
    %v1131 = vld [vmem:[%s5] sm:$0xff]
    %v1132 = vld [vmem:[%s5 + $0x8] sm:$0xff]
    %v1133 = vld [vmem:[%s5 + $0x10] sm:$0xff]
    %v1134 = vld [vmem:[%s5 + $0x18] sm:$0xff]
    %v1135 = vld [vmem:[%s5 + $0x20] sm:$0xff]
    %v1136 = vld [vmem:[%s5 + $0x28] sm:$0xff]
    %v1137 = vld [vmem:[%s5 + $0x30] sm:$0xff]
    %v1138 = vld [vmem:[%s5 + $0x38] sm:$0xff]
    %v1139 = vld [vmem:[%s5 + $0x40] sm:$0xff]
    %v1140 = vld [vmem:[%s5 + $0x48] sm:$0xff]
    %v1141 = vld [vmem:[%s5 + $0x50] sm:$0xff]
    %v1142 = vld [vmem:[%s5 + $0x58] sm:$0xff]
    %v1143 = vld [vmem:[%s5 + $0x60] sm:$0xff]
    %v1144 = vld [vmem:[%s5 + $0x68] sm:$0xff]
    %v1145 = vld [vmem:[%s5 + $0x70] sm:$0xff]
    %v1146 = vld [vmem:[%s5 + $0x78] sm:$0xff]
    %v1147 = vld [vmem:[%s5 + $0x80] sm:$0xff]
    %v1148 = vld [vmem:[%s5 + $0x88] sm:$0xff]
    %v1149 = vld [vmem:[%s5 + $0x90] sm:$0xff]
    %v1150 = vld [vmem:[%s5 + $0x98] sm:$0xff]
    %v1151 = vld [vmem:[%s5 + $0xa0] sm:$0xff]
    %v1152 = vld [vmem:[%s5 + $0xa8] sm:$0xff]
    %v1153 = vld [vmem:[%s5 + $0xb0] sm:$0xff]
    %v1154 = vld [vmem:[%s5 + $0xb8] sm:$0xff]
    %v1155 = vld [vmem:[%s5 + $0xc0] sm:$0xff]
    %v1156 = vld [vmem:[%s5 + $0xc8] sm:$0xff]
    %v1157 = vld [vmem:[%s5 + $0xd0] sm:$0xff]
    %v1158 = vld [vmem:[%s5 + $0xd8] sm:$0xff]
    %v1159 = vld [vmem:[%s5 + $0xe0] sm:$0xff]
    %v1160 = vld [vmem:[%s5 + $0xe8] sm:$0xff]
    %v1161 = vld [vmem:[%s5 + $0xf0] sm:$0xff]
    %v1162 = vld [vmem:[%s5 + $0xf8] sm:$0xff]
    %v1163 = vld [vmem:[%s5 + $0x100] sm:$0xff]
    %v1164 = vld [vmem:[%s5 + $0x108] sm:$0xff]
    %v1165 = vld [vmem:[%s5 + $0x110] sm:$0xff]
    %v1166 = vld [vmem:[%s5 + $0x118] sm:$0xff]
    %v1167 = vld [vmem:[%s5 + $0x120] sm:$0xff]
    %v1168 = vld [vmem:[%s5 + $0x128] sm:$0xff]
    %v1169 = vld [vmem:[%s5 + $0x130] sm:$0xff]
    %v1170 = vld [vmem:[%s5 + $0x138] sm:$0xff]
    %v1171 = vld [vmem:[%s5 + $0x140] sm:$0xff]
    %v1172 = vld [vmem:[%s5 + $0x148] sm:$0xff]
    %v1173 = vld [vmem:[%s5 + $0x150] sm:$0xff]
    %v1174 = vld [vmem:[%s5 + $0x158] sm:$0xff]
    %v1175 = vld [vmem:[%s5 + $0x160] sm:$0xff]
    %v1176 = vld [vmem:[%s5 + $0x168] sm:$0xff]
    %v1177 = vld [vmem:[%s5 + $0x170] sm:$0xff]
    %v1178 = vld [vmem:[%s5 + $0x178] sm:$0xff]
    %v1179 = vld [vmem:[%s5 + $0x180] sm:$0xff]
    %v1180 = vld [vmem:[%s5 + $0x188] sm:$0xff]
    %v1181 = vld [vmem:[%s5 + $0x190] sm:$0xff]
    %v1182 = vld [vmem:[%s5 + $0x198] sm:$0xff]
    %v1183 = vld [vmem:[%s5 + $0x1a0] sm:$0xff]
    %v1184 = vld [vmem:[%s5 + $0x1a8] sm:$0xff]
    %v1185 = vld [vmem:[%s5 + $0x1b0] sm:$0xff]
    %v1186 = vld [vmem:[%s5 + $0x1b8] sm:$0xff]
    %v1187 = vld [vmem:[%s5 + $0x1c0] sm:$0xff]
    %v1188 = vld [vmem:[%s5 + $0x1c8] sm:$0xff]
    %v1189 = vld [vmem:[%s5 + $0x1d0] sm:$0xff]
    %v1190 = vld [vmem:[%s5 + $0x1d8] sm:$0xff]
    %v1191 = vld [vmem:[%s5 + $0x1e0] sm:$0xff]
    %v1192 = vld [vmem:[%s5 + $0x1e8] sm:$0xff]
    %v1193 = vld [vmem:[%s5 + $0x1f0] sm:$0xff]
    %v1194 = vld [vmem:[%s5 + $0x1f8] sm:$0xff]
    %v1195 = vld [vmem:[%s5 + $0x200] sm:$0xff]
    %v1196 = vld [vmem:[%s5 + $0x208] sm:$0xff]
    %v1197 = vld [vmem:[%s5 + $0x210] sm:$0xff]
    %v1198 = vld [vmem:[%s5 + $0x218] sm:$0xff]
    %v1199 = vld [vmem:[%s5 + $0x220] sm:$0xff]
    %v1200 = vld [vmem:[%s5 + $0x228] sm:$0xff]
    %v1201 = vld [vmem:[%s5 + $0x230] sm:$0xff]
    %v1202 = vld [vmem:[%s5 + $0x238] sm:$0xff]
    %v1203 = vld [vmem:[%s5 + $0x240] sm:$0xff]
    %v1204 = vld [vmem:[%s5 + $0x248] sm:$0xff]
    %v1205 = vld [vmem:[%s5 + $0x250] sm:$0xff]
    %v1206 = vld [vmem:[%s5 + $0x258] sm:$0xff]
    %v1207 = vld [vmem:[%s5 + $0x260] sm:$0xff]
    %v1208 = vld [vmem:[%s5 + $0x268] sm:$0xff]
    %v1209 = vld [vmem:[%s5 + $0x270] sm:$0xff]
    %v1210 = vld [vmem:[%s5 + $0x278] sm:$0xff]
    %v1211 = vld [vmem:[%s5 + $0x280] sm:$0xff]
    %v1212 = vld [vmem:[%s5 + $0x288] sm:$0xff]
    %v1213 = vld [vmem:[%s5 + $0x290] sm:$0xff]
    %v1214 = vld [vmem:[%s5 + $0x298] sm:$0xff]
    %v1215 = vld [vmem:[%s5 + $0x2a0] sm:$0xff]
    %v1216 = vld [vmem:[%s5 + $0x2a8] sm:$0xff]
    %v1217 = vld [vmem:[%s5 + $0x2b0] sm:$0xff]
    %v1218 = vld [vmem:[%s5 + $0x2b8] sm:$0xff]
    %v1219 = vld [vmem:[%s5 + $0x2c0] sm:$0xff]
    %v1220 = vld [vmem:[%s5 + $0x2c8] sm:$0xff]
    %v1221 = vld [vmem:[%s5 + $0x2d0] sm:$0xff]
    %v1222 = vld [vmem:[%s5 + $0x2d8] sm:$0xff]
    %v1223 = vld [vmem:[%s5 + $0x2e0] sm:$0xff]
    %v1224 = vld [vmem:[%s5 + $0x2e8] sm:$0xff]
    %v1225 = vld [vmem:[%s5 + $0x2f0] sm:$0xff]
    %v1226 = vld [vmem:[%s5 + $0x2f8] sm:$0xff]
    %v1227 = vld [vmem:[%s5 + $0x300] sm:$0xff]
    %v1228 = vld [vmem:[%s5 + $0x308] sm:$0xff]
    %v1229 = vld [vmem:[%s5 + $0x310] sm:$0xff]
    %v1230 = vld [vmem:[%s5 + $0x318] sm:$0xff]
    %v1231 = vld [vmem:[%s5 + $0x320] sm:$0xff]
    %v1232 = vld [vmem:[%s5 + $0x328] sm:$0xff]
    %v1233 = vld [vmem:[%s5 + $0x330] sm:$0xff]
    %v1234 = vld [vmem:[%s5 + $0x338] sm:$0xff]
    %v1235 = vld [vmem:[%s5 + $0x340] sm:$0xff]
    %v1236 = vld [vmem:[%s5 + $0x348] sm:$0xff]
    %v1237 = vld [vmem:[%s5 + $0x350] sm:$0xff]
    %v1238 = vld [vmem:[%s5 + $0x358] sm:$0xff]
    %v1239 = vld [vmem:[%s5 + $0x360] sm:$0xff]
    %v1240 = vld [vmem:[%s5 + $0x368] sm:$0xff]
    %v1241 = vld [vmem:[%s5 + $0x370] sm:$0xff]
    %v1242 = vld [vmem:[%s5 + $0x378] sm:$0xff]
    %v1243 = vld [vmem:[%s6] sm:$0x3]
    %v1245 = vperm.slane %v1243, 0
    %v1246 = vperm.slane %v1243, 1
    %v1361 = vunpack.c.l.b16 %v1131
    %v1362 = vunpack.c.h.b16 %v1131
    %v1363 = vunpack.c.l.b16 %v1132
    %v1364 = vunpack.c.h.b16 %v1132
    %v1365 = vunpack.c.l.b16 %v1133
    %v1366 = vunpack.c.h.b16 %v1133
    %v1367 = vunpack.c.l.b16 %v1134
    %v1368 = vunpack.c.h.b16 %v1134
    %v1369 = vunpack.c.l.b16 %v1135
    %v1370 = vunpack.c.h.b16 %v1135
    %v1371 = vunpack.c.l.b16 %v1136
    %v1372 = vunpack.c.h.b16 %v1136
    %v1373 = vunpack.c.l.b16 %v1137
    %v1374 = vunpack.c.h.b16 %v1137
    %v1375 = vunpack.c.l.b16 %v1138
    %v1376 = vunpack.c.h.b16 %v1138
    %v1377 = vunpack.c.l.b16 %v1139
    %v1378 = vunpack.c.h.b16 %v1139
    %v1379 = vunpack.c.l.b16 %v1140
    %v1380 = vunpack.c.h.b16 %v1140
    %v1381 = vunpack.c.l.b16 %v1141
    %v1382 = vunpack.c.h.b16 %v1141
    %v1383 = vunpack.c.l.b16 %v1142
    %v1384 = vunpack.c.h.b16 %v1142
    %v1385 = vunpack.c.l.b16 %v1143
    %v1386 = vunpack.c.h.b16 %v1143
    %v1387 = vunpack.c.l.b16 %v1144
    %v1388 = vunpack.c.h.b16 %v1144
    %v1389 = vunpack.c.l.b16 %v1145
    %v1390 = vunpack.c.h.b16 %v1145
    %v1391 = vunpack.c.l.b16 %v1146
    %v1392 = vunpack.c.h.b16 %v1146
    %v1393 = vunpack.c.l.b16 %v1147
    %v1394 = vunpack.c.h.b16 %v1147
    %v1395 = vunpack.c.l.b16 %v1148
    %v1396 = vunpack.c.h.b16 %v1148
    %v1397 = vunpack.c.l.b16 %v1149
    %v1398 = vunpack.c.h.b16 %v1149
    %v1399 = vunpack.c.l.b16 %v1150
    %v1400 = vunpack.c.h.b16 %v1150
    %v1401 = vunpack.c.l.b16 %v1151
    %v1402 = vunpack.c.h.b16 %v1151
    %v1403 = vunpack.c.l.b16 %v1152
    %v1404 = vunpack.c.h.b16 %v1152
    %v1405 = vunpack.c.l.b16 %v1153
    %v1406 = vunpack.c.h.b16 %v1153
    %v1407 = vunpack.c.l.b16 %v1154
    %v1408 = vunpack.c.h.b16 %v1154
    %v1409 = vunpack.c.l.b16 %v1155
    %v1410 = vunpack.c.h.b16 %v1155
    %v1411 = vunpack.c.l.b16 %v1156
    %v1412 = vunpack.c.h.b16 %v1156
    %v1413 = vunpack.c.l.b16 %v1157
    %v1414 = vunpack.c.h.b16 %v1157
    %v1415 = vunpack.c.l.b16 %v1158
    %v1416 = vunpack.c.h.b16 %v1158
    %v1417 = vunpack.c.l.b16 %v1159
    %v1418 = vunpack.c.h.b16 %v1159
    %v1419 = vunpack.c.l.b16 %v1160
    %v1420 = vunpack.c.h.b16 %v1160
    %v1421 = vunpack.c.l.b16 %v1161
    %v1422 = vunpack.c.h.b16 %v1161
    %v1423 = vunpack.c.l.b16 %v1162
    %v1424 = vunpack.c.h.b16 %v1162
    %v1425 = vunpack.c.l.b16 %v1163
    %v1426 = vunpack.c.h.b16 %v1163
    %v1427 = vunpack.c.l.b16 %v1164
    %v1428 = vunpack.c.h.b16 %v1164
    %v1429 = vunpack.c.l.b16 %v1165
    %v1430 = vunpack.c.h.b16 %v1165
    %v1431 = vunpack.c.l.b16 %v1166
    %v1432 = vunpack.c.h.b16 %v1166
    %v1433 = vunpack.c.l.b16 %v1167
    %v1434 = vunpack.c.h.b16 %v1167
    %v1435 = vunpack.c.l.b16 %v1168
    %v1436 = vunpack.c.h.b16 %v1168
    %v1437 = vunpack.c.l.b16 %v1169
    %v1438 = vunpack.c.h.b16 %v1169
    %v1439 = vunpack.c.l.b16 %v1170
    %v1440 = vunpack.c.h.b16 %v1170
    %v1441 = vunpack.c.l.b16 %v1171
    %v1442 = vunpack.c.h.b16 %v1171
    %v1443 = vunpack.c.l.b16 %v1172
    %v1444 = vunpack.c.h.b16 %v1172
    %v1445 = vunpack.c.l.b16 %v1173
    %v1446 = vunpack.c.h.b16 %v1173
    %v1447 = vunpack.c.l.b16 %v1174
    %v1448 = vunpack.c.h.b16 %v1174
    %v1449 = vunpack.c.l.b16 %v1175
    %v1450 = vunpack.c.h.b16 %v1175
    %v1451 = vunpack.c.l.b16 %v1176
    %v1452 = vunpack.c.h.b16 %v1176
    %v1453 = vunpack.c.l.b16 %v1177
    %v1454 = vunpack.c.h.b16 %v1177
    %v1455 = vunpack.c.l.b16 %v1178
    %v1456 = vunpack.c.h.b16 %v1178
    %v1457 = vunpack.c.l.b16 %v1179
    %v1458 = vunpack.c.h.b16 %v1179
    %v1459 = vunpack.c.l.b16 %v1180
    %v1460 = vunpack.c.h.b16 %v1180
    %v1461 = vunpack.c.l.b16 %v1181
    %v1462 = vunpack.c.h.b16 %v1181
    %v1463 = vunpack.c.l.b16 %v1182
    %v1464 = vunpack.c.h.b16 %v1182
    %v1465 = vunpack.c.l.b16 %v1183
    %v1466 = vunpack.c.h.b16 %v1183
    %v1467 = vunpack.c.l.b16 %v1184
    %v1468 = vunpack.c.h.b16 %v1184
    %v1469 = vunpack.c.l.b16 %v1185
    %v1470 = vunpack.c.h.b16 %v1185
    %v1471 = vunpack.c.l.b16 %v1186
    %v1472 = vunpack.c.h.b16 %v1186
    %v1473 = vunpack.c.l.b16 %v1187
    %v1474 = vunpack.c.h.b16 %v1187
    %v1475 = vunpack.c.l.b16 %v1188
    %v1476 = vunpack.c.h.b16 %v1188
    %v1477 = vunpack.c.l.b16 %v1189
    %v1478 = vunpack.c.h.b16 %v1189
    %v1479 = vunpack.c.l.b16 %v1190
    %v1480 = vunpack.c.h.b16 %v1190
    %v1481 = vunpack.c.l.b16 %v1191
    %v1482 = vunpack.c.h.b16 %v1191
    %v1483 = vunpack.c.l.b16 %v1192
    %v1484 = vunpack.c.h.b16 %v1192
    %v1485 = vunpack.c.l.b16 %v1193
    %v1486 = vunpack.c.h.b16 %v1193
    %v1487 = vunpack.c.l.b16 %v1194
    %v1488 = vunpack.c.h.b16 %v1194
    %v1489 = vunpack.c.l.b16 %v1195
    %v1490 = vunpack.c.h.b16 %v1195
    %v1491 = vunpack.c.l.b16 %v1196
    %v1492 = vunpack.c.h.b16 %v1196
    %v1493 = vunpack.c.l.b16 %v1197
    %v1494 = vunpack.c.h.b16 %v1197
    %v1495 = vunpack.c.l.b16 %v1198
    %v1496 = vunpack.c.h.b16 %v1198
    %v1497 = vunpack.c.l.b16 %v1199
    %v1498 = vunpack.c.h.b16 %v1199
    %v1499 = vunpack.c.l.b16 %v1200
    %v1500 = vunpack.c.h.b16 %v1200
    %v1501 = vunpack.c.l.b16 %v1201
    %v1502 = vunpack.c.h.b16 %v1201
    %v1503 = vunpack.c.l.b16 %v1202
    %v1504 = vunpack.c.h.b16 %v1202
    %v1505 = vunpack.c.l.b16 %v1203
    %v1506 = vunpack.c.h.b16 %v1203
    %v1507 = vunpack.c.l.b16 %v1204
    %v1508 = vunpack.c.h.b16 %v1204
    %v1509 = vunpack.c.l.b16 %v1205
    %v1510 = vunpack.c.h.b16 %v1205
    %v1511 = vunpack.c.l.b16 %v1206
    %v1512 = vunpack.c.h.b16 %v1206
    %v1513 = vunpack.c.l.b16 %v1207
    %v1514 = vunpack.c.h.b16 %v1207
    %v1515 = vunpack.c.l.b16 %v1208
    %v1516 = vunpack.c.h.b16 %v1208
    %v1517 = vunpack.c.l.b16 %v1209
    %v1518 = vunpack.c.h.b16 %v1209
    %v1519 = vunpack.c.l.b16 %v1210
    %v1520 = vunpack.c.h.b16 %v1210
    %v1521 = vunpack.c.l.b16 %v1211
    %v1522 = vunpack.c.h.b16 %v1211
    %v1523 = vunpack.c.l.b16 %v1212
    %v1524 = vunpack.c.h.b16 %v1212
    %v1525 = vunpack.c.l.b16 %v1213
    %v1526 = vunpack.c.h.b16 %v1213
    %v1527 = vunpack.c.l.b16 %v1214
    %v1528 = vunpack.c.h.b16 %v1214
    %v1529 = vunpack.c.l.b16 %v1215
    %v1530 = vunpack.c.h.b16 %v1215
    %v1531 = vunpack.c.l.b16 %v1216
    %v1532 = vunpack.c.h.b16 %v1216
    %v1533 = vunpack.c.l.b16 %v1217
    %v1534 = vunpack.c.h.b16 %v1217
    %v1535 = vunpack.c.l.b16 %v1218
    %v1536 = vunpack.c.h.b16 %v1218
    %v1537 = vunpack.c.l.b16 %v1219
    %v1538 = vunpack.c.h.b16 %v1219
    %v1539 = vunpack.c.l.b16 %v1220
    %v1540 = vunpack.c.h.b16 %v1220
    %v1541 = vunpack.c.l.b16 %v1221
    %v1542 = vunpack.c.h.b16 %v1221
    %v1543 = vunpack.c.l.b16 %v1222
    %v1544 = vunpack.c.h.b16 %v1222
    %v1545 = vunpack.c.l.b16 %v1223
    %v1546 = vunpack.c.h.b16 %v1223
    %v1547 = vunpack.c.l.b16 %v1224
    %v1548 = vunpack.c.h.b16 %v1224
    %v1549 = vunpack.c.l.b16 %v1225
    %v1550 = vunpack.c.h.b16 %v1225
    %v1551 = vunpack.c.l.b16 %v1226
    %v1552 = vunpack.c.h.b16 %v1226
    %v1553 = vunpack.c.l.b16 %v1227
    %v1554 = vunpack.c.h.b16 %v1227
    %v1555 = vunpack.c.l.b16 %v1228
    %v1556 = vunpack.c.h.b16 %v1228
    %v1557 = vunpack.c.l.b16 %v1229
    %v1558 = vunpack.c.h.b16 %v1229
    %v1559 = vunpack.c.l.b16 %v1230
    %v1560 = vunpack.c.h.b16 %v1230
    %v1561 = vunpack.c.l.b16 %v1231
    %v1562 = vunpack.c.h.b16 %v1231
    %v1563 = vunpack.c.l.b16 %v1232
    %v1564 = vunpack.c.h.b16 %v1232
    %v1565 = vunpack.c.l.b16 %v1233
    %v1566 = vunpack.c.h.b16 %v1233
    %v1567 = vunpack.c.l.b16 %v1234
    %v1568 = vunpack.c.h.b16 %v1234
    %v1569 = vunpack.c.l.b16 %v1235
    %v1570 = vunpack.c.h.b16 %v1235
    %v1571 = vunpack.c.l.b16 %v1236
    %v1572 = vunpack.c.h.b16 %v1236
    %v1573 = vunpack.c.l.b16 %v1237
    %v1574 = vunpack.c.h.b16 %v1237
    %v1575 = vunpack.c.l.b16 %v1238
    %v1576 = vunpack.c.h.b16 %v1238
    %v1577 = vunpack.c.l.b16 %v1239
    %v1578 = vunpack.c.h.b16 %v1239
    %v1579 = vunpack.c.l.b16 %v1240
    %v1580 = vunpack.c.h.b16 %v1240
    %v1581 = vunpack.c.l.b16 %v1241
    %v1582 = vunpack.c.h.b16 %v1241
    %v1583 = vunpack.c.l.b16 %v1242
    %v1584 = vunpack.c.h.b16 %v1242
    %v1585 = vpack.c.b16 %v1363, %v1361
    %v1586 = vpack.c.b16 %v1364, %v1362
    %v1587 = vpack.c.b16 %v1367, %v1365
    %v1588 = vpack.c.b16 %v1368, %v1366
    %v1589 = vpack.c.b16 %v1371, %v1369
    %v1590 = vpack.c.b16 %v1372, %v1370
    %v1591 = vpack.c.b16 %v1375, %v1373
    %v1592 = vpack.c.b16 %v1376, %v1374
    %v1593 = vpack.c.b16 %v1379, %v1377
    %v1594 = vpack.c.b16 %v1380, %v1378
    %v1595 = vpack.c.b16 %v1383, %v1381
    %v1596 = vpack.c.b16 %v1384, %v1382
    %v1597 = vpack.c.b16 %v1387, %v1385
    %v1598 = vpack.c.b16 %v1388, %v1386
    %v1599 = vpack.c.b16 %v1391, %v1389
    %v1600 = vpack.c.b16 %v1392, %v1390
    %v1601 = vpack.c.b16 %v1395, %v1393
    %v1602 = vpack.c.b16 %v1396, %v1394
    %v1603 = vpack.c.b16 %v1399, %v1397
    %v1604 = vpack.c.b16 %v1400, %v1398
    %v1605 = vpack.c.b16 %v1403, %v1401
    %v1606 = vpack.c.b16 %v1404, %v1402
    %v1607 = vpack.c.b16 %v1407, %v1405
    %v1608 = vpack.c.b16 %v1408, %v1406
    %v1609 = vpack.c.b16 %v1411, %v1409
    %v1610 = vpack.c.b16 %v1412, %v1410
    %v1611 = vpack.c.b16 %v1415, %v1413
    %v1612 = vpack.c.b16 %v1416, %v1414
    %v1613 = vpack.c.b16 %v1419, %v1417
    %v1614 = vpack.c.b16 %v1420, %v1418
    %v1615 = vpack.c.b16 %v1423, %v1421
    %v1616 = vpack.c.b16 %v1424, %v1422
    %v1617 = vpack.c.b16 %v1427, %v1425
    %v1618 = vpack.c.b16 %v1428, %v1426
    %v1619 = vpack.c.b16 %v1431, %v1429
    %v1620 = vpack.c.b16 %v1432, %v1430
    %v1621 = vpack.c.b16 %v1435, %v1433
    %v1622 = vpack.c.b16 %v1436, %v1434
    %v1623 = vpack.c.b16 %v1439, %v1437
    %v1624 = vpack.c.b16 %v1440, %v1438
    %v1625 = vpack.c.b16 %v1443, %v1441
    %v1626 = vpack.c.b16 %v1444, %v1442
    %v1627 = vpack.c.b16 %v1447, %v1445
    %v1628 = vpack.c.b16 %v1448, %v1446
    %v1629 = vpack.c.b16 %v1451, %v1449
    %v1630 = vpack.c.b16 %v1452, %v1450
    %v1631 = vpack.c.b16 %v1455, %v1453
    %v1632 = vpack.c.b16 %v1456, %v1454
    %v1633 = vpack.c.b16 %v1459, %v1457
    %v1634 = vpack.c.b16 %v1460, %v1458
    %v1635 = vpack.c.b16 %v1463, %v1461
    %v1636 = vpack.c.b16 %v1464, %v1462
    %v1637 = vpack.c.b16 %v1467, %v1465
    %v1638 = vpack.c.b16 %v1468, %v1466
    %v1639 = vpack.c.b16 %v1471, %v1469
    %v1640 = vpack.c.b16 %v1472, %v1470
    %v1641 = vpack.c.b16 %v1475, %v1473
    %v1642 = vpack.c.b16 %v1476, %v1474
    %v1643 = vpack.c.b16 %v1479, %v1477
    %v1644 = vpack.c.b16 %v1480, %v1478
    %v1645 = vpack.c.b16 %v1483, %v1481
    %v1646 = vpack.c.b16 %v1484, %v1482
    %v1647 = vpack.c.b16 %v1487, %v1485
    %v1648 = vpack.c.b16 %v1488, %v1486
    %v1649 = vpack.c.b16 %v1491, %v1489
    %v1650 = vpack.c.b16 %v1492, %v1490
    %v1651 = vpack.c.b16 %v1495, %v1493
    %v1652 = vpack.c.b16 %v1496, %v1494
    %v1653 = vpack.c.b16 %v1499, %v1497
    %v1654 = vpack.c.b16 %v1500, %v1498
    %v1655 = vpack.c.b16 %v1503, %v1501
    %v1656 = vpack.c.b16 %v1504, %v1502
    %v1657 = vpack.c.b16 %v1507, %v1505
    %v1658 = vpack.c.b16 %v1508, %v1506
    %v1659 = vpack.c.b16 %v1511, %v1509
    %v1660 = vpack.c.b16 %v1512, %v1510
    %v1661 = vpack.c.b16 %v1515, %v1513
    %v1662 = vpack.c.b16 %v1516, %v1514
    %v1663 = vpack.c.b16 %v1519, %v1517
    %v1664 = vpack.c.b16 %v1520, %v1518
    %v1665 = vpack.c.b16 %v1523, %v1521
    %v1666 = vpack.c.b16 %v1524, %v1522
    %v1667 = vpack.c.b16 %v1527, %v1525
    %v1668 = vpack.c.b16 %v1528, %v1526
    %v1669 = vpack.c.b16 %v1531, %v1529
    %v1670 = vpack.c.b16 %v1532, %v1530
    %v1671 = vpack.c.b16 %v1535, %v1533
    %v1672 = vpack.c.b16 %v1536, %v1534
    %v1673 = vpack.c.b16 %v1539, %v1537
    %v1674 = vpack.c.b16 %v1540, %v1538
    %v1675 = vpack.c.b16 %v1543, %v1541
    %v1676 = vpack.c.b16 %v1544, %v1542
    %v1677 = vpack.c.b16 %v1547, %v1545
    %v1678 = vpack.c.b16 %v1548, %v1546
    %v1679 = vpack.c.b16 %v1551, %v1549
    %v1680 = vpack.c.b16 %v1552, %v1550
    %v1681 = vpack.c.b16 %v1555, %v1553
    %v1682 = vpack.c.b16 %v1556, %v1554
    %v1683 = vpack.c.b16 %v1559, %v1557
    %v1684 = vpack.c.b16 %v1560, %v1558
    %v1685 = vpack.c.b16 %v1563, %v1561
    %v1686 = vpack.c.b16 %v1564, %v1562
    %v1687 = vpack.c.b16 %v1567, %v1565
    %v1688 = vpack.c.b16 %v1568, %v1566
    %v1689 = vpack.c.b16 %v1571, %v1569
    %v1690 = vpack.c.b16 %v1572, %v1570
    %v1691 = vpack.c.b16 %v1575, %v1573
    %v1692 = vpack.c.b16 %v1576, %v1574
    %v1693 = vpack.c.b16 %v1579, %v1577
    %v1694 = vpack.c.b16 %v1580, %v1578
    %v1695 = vpack.c.b16 %v1583, %v1581
    %v1696 = vpack.c.b16 %v1584, %v1582
    %1809 = vmatpush.bf16.msra.mxu0 %v1599
    %1810 = vmatpush.bf16.msra.mxu0 %v1597
    %1811 = vmatpush.bf16.msra.mxu0 %v1595
    %1812 = vmatpush.bf16.msra.mxu0 %v1593
    %1813 = vmatpush.bf16.msra.mxu0 %v1591
    %1814 = vmatpush.bf16.msra.mxu0 %v1589
    %1815 = vmatpush.bf16.msra.mxu0 %v1587
    %1816 = vmatpush.bf16.msra.mxu0 %v1585
    %1817 = vmatmul.bf16.gmra.mxu0 %v1117
    %v1818 = vpop.f32.mrf.mxu0
    %v1819 = vadd.f32 %v1245, %v1818
    %v1820 = vpop.f32.mrf.mxu0
    %v1821 = vadd.f32 %v1245, %v1820
    %1822 = vmatmul.bf16.gmra.mxu0 %v1124
    %v1823 = vpop.f32.mrf.mxu0
    %v1824 = vadd.f32 %v1245, %v1823
    %v1825 = vpop.f32.mrf.mxu0
    %v1826 = vadd.f32 %v1245, %v1825
    %1827 = vdwg.mxu0
    %1828 = vmatpush.bf16.msra.mxu0 %v1615
    %1829 = vmatpush.bf16.msra.mxu0 %v1613
    %1830 = vmatpush.bf16.msra.mxu0 %v1611
    %1831 = vmatpush.bf16.msra.mxu0 %v1609
    %1832 = vmatpush.bf16.msra.mxu0 %v1607
    %1833 = vmatpush.bf16.msra.mxu0 %v1605
    %1834 = vmatpush.bf16.msra.mxu0 %v1603
    %1835 = vmatpush.bf16.msra.mxu0 %v1601
    %1836 = vmatmul.bf16.gmra.mxu0 %v1118
    %v1837 = vpop.f32.mrf.mxu0
    %v1838 = vadd.f32 %v1819, %v1837
    %v1839 = vpop.f32.mrf.mxu0
    %v1840 = vadd.f32 %v1821, %v1839
    %1841 = vmatmul.bf16.gmra.mxu0 %v1125
    %v1842 = vpop.f32.mrf.mxu0
    %v1843 = vadd.f32 %v1824, %v1842
    %v1844 = vpop.f32.mrf.mxu0
    %v1845 = vadd.f32 %v1826, %v1844
    %1846 = vdwg.mxu0
    %1847 = vmatpush.bf16.msra.mxu0 %v1631
    %1848 = vmatpush.bf16.msra.mxu0 %v1629
    %1849 = vmatpush.bf16.msra.mxu0 %v1627
    %1850 = vmatpush.bf16.msra.mxu0 %v1625
    %1851 = vmatpush.bf16.msra.mxu0 %v1623
    %1852 = vmatpush.bf16.msra.mxu0 %v1621
    %1853 = vmatpush.bf16.msra.mxu0 %v1619
    %1854 = vmatpush.bf16.msra.mxu0 %v1617
    %1855 = vmatmul.bf16.gmra.mxu0 %v1119
    %v1856 = vpop.f32.mrf.mxu0
    %v1857 = vadd.f32 %v1838, %v1856
    %v1858 = vpop.f32.mrf.mxu0
    %v1859 = vadd.f32 %v1840, %v1858
    %1860 = vmatmul.bf16.gmra.mxu0 %v1126
    %v1861 = vpop.f32.mrf.mxu0
    %v1862 = vadd.f32 %v1843, %v1861
    %v1863 = vpop.f32.mrf.mxu0
    %v1864 = vadd.f32 %v1845, %v1863
    %1865 = vdwg.mxu0
    %1866 = vmatpush.bf16.msra.mxu0 %v1647
    %1867 = vmatpush.bf16.msra.mxu0 %v1645
    %1868 = vmatpush.bf16.msra.mxu0 %v1643
    %1869 = vmatpush.bf16.msra.mxu0 %v1641
    %1870 = vmatpush.bf16.msra.mxu0 %v1639
    %1871 = vmatpush.bf16.msra.mxu0 %v1637
    %1872 = vmatpush.bf16.msra.mxu0 %v1635
    %1873 = vmatpush.bf16.msra.mxu0 %v1633
    %1874 = vmatmul.bf16.gmra.mxu0 %v1120
    %v1875 = vpop.f32.mrf.mxu0
    %v1876 = vadd.f32 %v1857, %v1875
    %v1877 = vpop.f32.mrf.mxu0
    %v1878 = vadd.f32 %v1859, %v1877
    %1879 = vmatmul.bf16.gmra.mxu0 %v1127
    %v1880 = vpop.f32.mrf.mxu0
    %v1881 = vadd.f32 %v1862, %v1880
    %v1882 = vpop.f32.mrf.mxu0
    %v1883 = vadd.f32 %v1864, %v1882
    %1884 = vdwg.mxu0
    %1885 = vmatpush.bf16.msra.mxu0 %v1663
    %1886 = vmatpush.bf16.msra.mxu0 %v1661
    %1887 = vmatpush.bf16.msra.mxu0 %v1659
    %1888 = vmatpush.bf16.msra.mxu0 %v1657
    %1889 = vmatpush.bf16.msra.mxu0 %v1655
    %1890 = vmatpush.bf16.msra.mxu0 %v1653
    %1891 = vmatpush.bf16.msra.mxu0 %v1651
    %1892 = vmatpush.bf16.msra.mxu0 %v1649
    %1893 = vmatmul.bf16.gmra.mxu0 %v1121
    %v1894 = vpop.f32.mrf.mxu0
    %v1895 = vadd.f32 %v1876, %v1894
    %v1896 = vpop.f32.mrf.mxu0
    %v1897 = vadd.f32 %v1878, %v1896
    %1898 = vmatmul.bf16.gmra.mxu0 %v1128
    %v1899 = vpop.f32.mrf.mxu0
    %v1900 = vadd.f32 %v1881, %v1899
    %v1901 = vpop.f32.mrf.mxu0
    %v1902 = vadd.f32 %v1883, %v1901
    %1903 = vdwg.mxu0
    %1904 = vmatpush.bf16.msra.mxu0 %v1679
    %1905 = vmatpush.bf16.msra.mxu0 %v1677
    %1906 = vmatpush.bf16.msra.mxu0 %v1675
    %1907 = vmatpush.bf16.msra.mxu0 %v1673
    %1908 = vmatpush.bf16.msra.mxu0 %v1671
    %1909 = vmatpush.bf16.msra.mxu0 %v1669
    %1910 = vmatpush.bf16.msra.mxu0 %v1667
    %1911 = vmatpush.bf16.msra.mxu0 %v1665
    %1912 = vmatmul.bf16.gmra.mxu0 %v1122
    %v1913 = vpop.f32.mrf.mxu0
    %v1914 = vadd.f32 %v1895, %v1913
    %v1915 = vpop.f32.mrf.mxu0
    %v1916 = vadd.f32 %v1897, %v1915
    %1917 = vmatmul.bf16.gmra.mxu0 %v1129
    %v1918 = vpop.f32.mrf.mxu0
    %v1919 = vadd.f32 %v1900, %v1918
    %v1920 = vpop.f32.mrf.mxu0
    %v1921 = vadd.f32 %v1902, %v1920
    %1922 = vdwg.mxu0
    %1923 = vmatpush.bf16.msra.mxu0 %v1695
    %1924 = vmatpush.bf16.msra.mxu0 %v1693
    %1925 = vmatpush.bf16.msra.mxu0 %v1691
    %1926 = vmatpush.bf16.msra.mxu0 %v1689
    %1927 = vmatpush.bf16.msra.mxu0 %v1687
    %1928 = vmatpush.bf16.msra.mxu0 %v1685
    %1929 = vmatpush.bf16.msra.mxu0 %v1683
    %1930 = vmatpush.bf16.msra.mxu0 %v1681
    %1931 = vmatmul.bf16.gmra.mxu0 %v1123
    %v1932 = vpop.f32.mrf.mxu0
    %v1933 = vadd.f32 %v1914, %v1932
    %v1934 = vpop.f32.mrf.mxu0
    %v1935 = vadd.f32 %v1916, %v1934
    %1936 = vmatmul.bf16.gmra.mxu0 %v1130
    %v1937 = vpop.f32.mrf.mxu0
    %v1938 = vadd.f32 %v1919, %v1937
    %v1939 = vpop.f32.mrf.mxu0
    %v1940 = vadd.f32 %v1921, %v1939
    %1941 = vdwg.mxu0
    %1942 = vmatpush.bf16.msra.mxu0 %v1600
    %1943 = vmatpush.bf16.msra.mxu0 %v1598
    %1944 = vmatpush.bf16.msra.mxu0 %v1596
    %1945 = vmatpush.bf16.msra.mxu0 %v1594
    %1946 = vmatpush.bf16.msra.mxu0 %v1592
    %1947 = vmatpush.bf16.msra.mxu0 %v1590
    %1948 = vmatpush.bf16.msra.mxu0 %v1588
    %1949 = vmatpush.bf16.msra.mxu0 %v1586
    %1950 = vmatmul.bf16.gmra.mxu0 %v1117
    %v1951 = vpop.f32.mrf.mxu0
    %v1952 = vadd.f32 %v1246, %v1951
    %v1953 = vpop.f32.mrf.mxu0
    %v1954 = vadd.f32 %v1246, %v1953
    %1955 = vmatmul.bf16.gmra.mxu0 %v1124
    %v1956 = vpop.f32.mrf.mxu0
    %v1957 = vadd.f32 %v1246, %v1956
    %v1958 = vpop.f32.mrf.mxu0
    %v1959 = vadd.f32 %v1246, %v1958
    %1960 = vdwg.mxu0
    %1961 = vmatpush.bf16.msra.mxu0 %v1616
    %1962 = vmatpush.bf16.msra.mxu0 %v1614
    %1963 = vmatpush.bf16.msra.mxu0 %v1612
    %1964 = vmatpush.bf16.msra.mxu0 %v1610
    %1965 = vmatpush.bf16.msra.mxu0 %v1608
    %1966 = vmatpush.bf16.msra.mxu0 %v1606
    %1967 = vmatpush.bf16.msra.mxu0 %v1604
    %1968 = vmatpush.bf16.msra.mxu0 %v1602
    %1969 = vmatmul.bf16.gmra.mxu0 %v1118
    %v1970 = vpop.f32.mrf.mxu0
    %v1971 = vadd.f32 %v1952, %v1970
    %v1972 = vpop.f32.mrf.mxu0
    %v1973 = vadd.f32 %v1954, %v1972
    %1974 = vmatmul.bf16.gmra.mxu0 %v1125
    %v1975 = vpop.f32.mrf.mxu0
    %v1976 = vadd.f32 %v1957, %v1975
    %v1977 = vpop.f32.mrf.mxu0
    %v1978 = vadd.f32 %v1959, %v1977
    %1979 = vdwg.mxu0
    %1980 = vmatpush.bf16.msra.mxu0 %v1632
    %1981 = vmatpush.bf16.msra.mxu0 %v1630
    %1982 = vmatpush.bf16.msra.mxu0 %v1628
    %1983 = vmatpush.bf16.msra.mxu0 %v1626
    %1984 = vmatpush.bf16.msra.mxu0 %v1624
    %1985 = vmatpush.bf16.msra.mxu0 %v1622
    %1986 = vmatpush.bf16.msra.mxu0 %v1620
    %1987 = vmatpush.bf16.msra.mxu0 %v1618
    %1988 = vmatmul.bf16.gmra.mxu0 %v1119
    %v1989 = vpop.f32.mrf.mxu0
    %v1990 = vadd.f32 %v1971, %v1989
    %v1991 = vpop.f32.mrf.mxu0
    %v1992 = vadd.f32 %v1973, %v1991
    %1993 = vmatmul.bf16.gmra.mxu0 %v1126
    %v1994 = vpop.f32.mrf.mxu0
    %v1995 = vadd.f32 %v1976, %v1994
    %v1996 = vpop.f32.mrf.mxu0
    %v1997 = vadd.f32 %v1978, %v1996
    %1998 = vdwg.mxu0
    %1999 = vmatpush.bf16.msra.mxu0 %v1648
    %2000 = vmatpush.bf16.msra.mxu0 %v1646
    %2001 = vmatpush.bf16.msra.mxu0 %v1644
    %2002 = vmatpush.bf16.msra.mxu0 %v1642
    %2003 = vmatpush.bf16.msra.mxu0 %v1640
    %2004 = vmatpush.bf16.msra.mxu0 %v1638
    %2005 = vmatpush.bf16.msra.mxu0 %v1636
    %2006 = vmatpush.bf16.msra.mxu0 %v1634
    %2007 = vmatmul.bf16.gmra.mxu0 %v1120
    %v2008 = vpop.f32.mrf.mxu0
    %v2009 = vadd.f32 %v1990, %v2008
    %v2010 = vpop.f32.mrf.mxu0
    %v2011 = vadd.f32 %v1992, %v2010
    %2012 = vmatmul.bf16.gmra.mxu0 %v1127
    %v2013 = vpop.f32.mrf.mxu0
    %v2014 = vadd.f32 %v1995, %v2013
    %v2015 = vpop.f32.mrf.mxu0
    %v2016 = vadd.f32 %v1997, %v2015
    %2017 = vdwg.mxu0
    %2018 = vmatpush.bf16.msra.mxu0 %v1664
    %2019 = vmatpush.bf16.msra.mxu0 %v1662
    %2020 = vmatpush.bf16.msra.mxu0 %v1660
    %2021 = vmatpush.bf16.msra.mxu0 %v1658
    %2022 = vmatpush.bf16.msra.mxu0 %v1656
    %2023 = vmatpush.bf16.msra.mxu0 %v1654
    %2024 = vmatpush.bf16.msra.mxu0 %v1652
    %2025 = vmatpush.bf16.msra.mxu0 %v1650
    %2026 = vmatmul.bf16.gmra.mxu0 %v1121
    %v2027 = vpop.f32.mrf.mxu0
    %v2028 = vadd.f32 %v2009, %v2027
    %v2029 = vpop.f32.mrf.mxu0
    %v2030 = vadd.f32 %v2011, %v2029
    %2031 = vmatmul.bf16.gmra.mxu0 %v1128
    %v2032 = vpop.f32.mrf.mxu0
    %v2033 = vadd.f32 %v2014, %v2032
    %v2034 = vpop.f32.mrf.mxu0
    %v2035 = vadd.f32 %v2016, %v2034
    %2036 = vdwg.mxu0
    %2037 = vmatpush.bf16.msra.mxu0 %v1680
    %2038 = vmatpush.bf16.msra.mxu0 %v1678
    %2039 = vmatpush.bf16.msra.mxu0 %v1676
    %2040 = vmatpush.bf16.msra.mxu0 %v1674
    %2041 = vmatpush.bf16.msra.mxu0 %v1672
    %2042 = vmatpush.bf16.msra.mxu0 %v1670
    %2043 = vmatpush.bf16.msra.mxu0 %v1668
    %2044 = vmatpush.bf16.msra.mxu0 %v1666
    %2045 = vmatmul.bf16.gmra.mxu0 %v1122
    %v2046 = vpop.f32.mrf.mxu0
    %v2047 = vadd.f32 %v2028, %v2046
    %v2048 = vpop.f32.mrf.mxu0
    %v2049 = vadd.f32 %v2030, %v2048
    %2050 = vmatmul.bf16.gmra.mxu0 %v1129
    %v2051 = vpop.f32.mrf.mxu0
    %v2052 = vadd.f32 %v2033, %v2051
    %v2053 = vpop.f32.mrf.mxu0
    %v2054 = vadd.f32 %v2035, %v2053
    %2055 = vdwg.mxu0
    %2056 = vmatpush.bf16.msra.mxu0 %v1696
    %2057 = vmatpush.bf16.msra.mxu0 %v1694
    %2058 = vmatpush.bf16.msra.mxu0 %v1692
    %2059 = vmatpush.bf16.msra.mxu0 %v1690
    %2060 = vmatpush.bf16.msra.mxu0 %v1688
    %2061 = vmatpush.bf16.msra.mxu0 %v1686
    %2062 = vmatpush.bf16.msra.mxu0 %v1684
    %2063 = vmatpush.bf16.msra.mxu0 %v1682
    %2064 = vmatmul.bf16.gmra.mxu0 %v1123
    %v2065 = vpop.f32.mrf.mxu0
    %v2066 = vadd.f32 %v2047, %v2065
    %v2067 = vpop.f32.mrf.mxu0
    %v2068 = vadd.f32 %v2049, %v2067
    %2069 = vmatmul.bf16.gmra.mxu0 %v1130
    %v2070 = vpop.f32.mrf.mxu0
    %v2071 = vadd.f32 %v2052, %v2070
    %v2072 = vpop.f32.mrf.mxu0
    %v2073 = vadd.f32 %v2054, %v2072
    %2074 = vdwg.mxu0
    %v2075 = vadd.f32 %v1933, %v1935
    %v2076 = vadd.f32 %v2075, %v1938
    %v2077 = vadd.f32 %v2076, %v1940
    %v2078 = vrot.slane %v2077, 4
    %v2079 = vadd.f32 %v2077, %v2078
    %v2080 = vrot.slane %v2079, 2
    %v2081 = vadd.f32 %v2079, %v2080
    %v2082 = vrot.slane %v2081, 1
    %v2083 = vadd.f32 %v2081, %v2082
    %v2084 = vadd.f32 %v2066, %v2068
    %v2085 = vadd.f32 %v2084, %v2071
    %v2086 = vadd.f32 %v2085, %v2073
    %v2087 = vrot.slane %v2086, 4
    %v2088 = vadd.f32 %v2086, %v2087
    %v2089 = vrot.slane %v2088, 2
    %v2090 = vadd.f32 %v2088, %v2089
    %v2091 = vrot.slane %v2090, 1
    %v2092 = vadd.f32 %v2090, %v2091
    %v2093 = vmul.f32 %v1933, %v1933
    %v2094 = vmul.f32 %v2066, %v2066
    %v2095 = vmul.f32 %v1935, %v1935
    %v2096 = vmul.f32 %v2068, %v2068
    %v2097 = vmul.f32 %v1938, %v1938
    %v2098 = vmul.f32 %v2071, %v2071
    %v2099 = vmul.f32 %v1940, %v1940
    %v2100 = vmul.f32 %v2073, %v2073
    %v2101 = vadd.f32 %v2093, %v2095
    %v2102 = vadd.f32 %v2101, %v2097
    %v2103 = vadd.f32 %v2102, %v2099
    %v2104 = vrot.slane %v2103, 4
    %v2105 = vadd.f32 %v2103, %v2104
    %v2106 = vrot.slane %v2105, 2
    %v2107 = vadd.f32 %v2105, %v2106
    %v2108 = vrot.slane %v2107, 1
    %v2109 = vadd.f32 %v2107, %v2108
    %v2110 = vadd.f32 %v2094, %v2096
    %v2111 = vadd.f32 %v2110, %v2098
    %v2112 = vadd.f32 %v2111, %v2100
    %v2113 = vrot.slane %v2112, 4
    %v2114 = vadd.f32 %v2112, %v2113
    %v2115 = vrot.slane %v2114, 2
    %v2116 = vadd.f32 %v2114, %v2115
    %v2117 = vrot.slane %v2116, 1
    %v2118 = vadd.f32 %v2116, %v2117
    %2120 = vrot.lane.b32.xlu0 %v2083, 64
    %v2121 = vpop.permute.xlu0 %2120
    %v2123 = vadd.f32 %v2083, %v2121
    %2125 = vrot.lane.b32.xlu0 %v2109, 64
    %v2126 = vpop.permute.xlu0 %2125
    %v2128 = vadd.f32 %v2109, %v2126
    %v2129 = vadd.f32 %v2123, %v2092
    %v2130 = vadd.f32 %v2128, %v2118
    %2132 = vrot.lane.b32.xlu0 %v2092, 64
    %v2133 = vpop.permute.xlu0 %2132
    %v2135 = vadd.f32 %v2129, %v2133
    %2137 = vrot.lane.b32.xlu0 %v2118, 64
    %v2138 = vpop.permute.xlu0 %2137
    %v2140 = vadd.f32 %v2130, %v2138
    %v2141 = vmul.f32 %v2135, 0.0078125
    %v2142 = vmul.f32 %v2140, 0.0078125
    %v2143 = vmul.f32 %v2141, %v2141
    %v2144 = vsub.f32 %v2142, %v2143
    %v2145 = vmax.f32 %v2144, 0.0
    %v2146 = vadd.f32 %v2145, 1e-05
    %v2147 = vrsqrt.pop %v2146
    %v2148 = vmul.f32 %v2147, %v2146
    %v2149 = vmul.f32 %v2148, %v2147
    %v2150 = vmul.f32 0.5, %v2149
    %v2151 = vsub.f32 1.5, %v2150
    %v2152 = vmul.f32 %v2147, %v2151
    %vm2153 = vweird.f32 %v2146
    %vm2154 = vweird.f32 %v2147
    %vm2155 = vmor %vm2153, %vm2154
    %v2156 = vsel %vm2155, %v2147, %v2152
    %v2157 = vld [vmem:[%s7] sm:$0x1]
    %v2158 = vmul.f32 %v2156, %v2157
    %v2159 = vld [vmem:[%s8] sm:$0x1]
    %v2160 = vmul.f32 %v2141, %v2158
    %v2161 = vsub.f32 %v2159, %v2160
    %2163 = vrot.lane.b32.xlu0 %v2158, 64
    %v2164 = vpop.permute.xlu0 %2163
    %v2166 = vsel %vm560, %v2158, %v2164
    %v2168 = vperm.slane %v2161, 0
    %2169 = vrot.lane.b32.xlu0 %v2168, 64
    %v2170 = vpop.permute.xlu0 %2169
    %v2172 = vsel %vm560, %v2161, %v2170
    %v2173 = vperm.slane %v2166, 0
    %v2174 = vmul.f32 %v1933, %v2173
    %v2175 = vmul.f32 %v2066, %v2173
    %v2176 = vmul.f32 %v1935, %v2173
    %v2177 = vmul.f32 %v2068, %v2173
    %v2178 = vmul.f32 %v1938, %v2173
    %v2179 = vmul.f32 %v2071, %v2173
    %v2180 = vmul.f32 %v1940, %v2173
    %v2181 = vmul.f32 %v2073, %v2173
    %v2182 = vperm.slane %v2172, 0
    %v2183 = vadd.f32 %v2174, %v2182
    %v2184 = vadd.f32 %v2175, %v2182
    %v2185 = vadd.f32 %v2176, %v2182
    %v2186 = vadd.f32 %v2177, %v2182
    %v2187 = vadd.f32 %v2178, %v2182
    %v2188 = vadd.f32 %v2179, %v2182
    %v2189 = vadd.f32 %v2180, %v2182
    %v2190 = vadd.f32 %v2181, %v2182
    %v2191 = vmax.f32 %v2183, 0.0
    %v2192 = vmax.f32 %v2184, 0.0
    %v2193 = vmax.f32 %v2185, 0.0
    %v2194 = vmax.f32 %v2186, 0.0
    %v2195 = vmax.f32 %v2187, 0.0
    %v2196 = vmax.f32 %v2188, 0.0
    %v2197 = vmax.f32 %v2189, 0.0
    %v2198 = vmax.f32 %v2190, 0.0
    %v2199 = vmax.f32 %v2191, %v2193
    %v2200 = vmax.f32 %v2192, %v2194
    %v2201 = vmax.f32 %v2195, %v2197
    %v2202 = vmax.f32 %v2196, %v2198
    %2204 = vrot.lane.b32.xlu0 %v2199, 64
    %v2205 = vpop.permute.xlu0 %2204
    %v2207 = vmax.f32 %v2199, %v2205
    %2209 = vrot.lane.b32.xlu0 %v2200, 64
    %v2210 = vpop.permute.xlu0 %2209
    %v2212 = vmax.f32 %v2200, %v2210
    %2214 = vrot.lane.b32.xlu0 %v2201, 64
    %v2215 = vpop.permute.xlu0 %2214
    %v2217 = vmax.f32 %v2201, %v2215
    %2219 = vrot.lane.b32.xlu0 %v2202, 64
    %v2220 = vpop.permute.xlu0 %2219
    %v2222 = vmax.f32 %v2202, %v2220
    %2224 = vrot.lane.b32.xlu0 %v2212, 64
    %v2225 = vpop.permute.xlu0 %2224
    %2228 = vrot.lane.b32.xlu0 %v2222, 64
    %v2229 = vpop.permute.xlu0 %2228
    %v2231 = vsel %vm560, %v2207, %v2225
    %v2232 = vsel %vm560, %v2217, %v2229
    %v2233 = vpack.c.bf16 %v2231, %v2231
    %v2234 = vpack.c.bf16 %v2232, %v2232
    %v2235 = vld [vmem:[%s9] sm:$0xf]
    %v2236 = vld [vmem:[%s9 + $0x4] sm:$0xf]
    %v2237 = vld [vmem:[%s9 + $0x8] sm:$0xf]
    %v2238 = vld [vmem:[%s9 + $0xc] sm:$0xf]
    %v2239 = vld [vmem:[%s9 + $0x10] sm:$0xf]
    %v2240 = vld [vmem:[%s9 + $0x14] sm:$0xf]
    %v2241 = vld [vmem:[%s9 + $0x18] sm:$0xf]
    %v2242 = vld [vmem:[%s9 + $0x1c] sm:$0xf]
    %v2243 = vld [vmem:[%s9 + $0x20] sm:$0xf]
    %v2244 = vld [vmem:[%s9 + $0x24] sm:$0xf]
    %v2245 = vld [vmem:[%s9 + $0x28] sm:$0xf]
    %v2246 = vld [vmem:[%s9 + $0x2c] sm:$0xf]
    %v2247 = vld [vmem:[%s9 + $0x30] sm:$0xf]
    %v2248 = vld [vmem:[%s9 + $0x34] sm:$0xf]
    %v2249 = vld [vmem:[%s9 + $0x38] sm:$0xf]
    %v2250 = vld [vmem:[%s9 + $0x3c] sm:$0xf]
    %v2251 = vld [vmem:[%s9 + $0x40] sm:$0xf]
    %v2252 = vld [vmem:[%s9 + $0x44] sm:$0xf]
    %v2253 = vld [vmem:[%s9 + $0x48] sm:$0xf]
    %v2254 = vld [vmem:[%s9 + $0x4c] sm:$0xf]
    %v2255 = vld [vmem:[%s9 + $0x50] sm:$0xf]
    %v2256 = vld [vmem:[%s9 + $0x54] sm:$0xf]
    %v2257 = vld [vmem:[%s9 + $0x58] sm:$0xf]
    %v2258 = vld [vmem:[%s9 + $0x5c] sm:$0xf]
    %v2259 = vld [vmem:[%s9 + $0x60] sm:$0xf]
    %v2260 = vld [vmem:[%s9 + $0x64] sm:$0xf]
    %v2261 = vld [vmem:[%s9 + $0x68] sm:$0xf]
    %v2262 = vld [vmem:[%s9 + $0x6c] sm:$0xf]
    %v2263 = vld [vmem:[%s9 + $0x70] sm:$0xf]
    %v2264 = vld [vmem:[%s9 + $0x74] sm:$0xf]
    %v2265 = vld [vmem:[%s9 + $0x78] sm:$0xf]
    %v2266 = vld [vmem:[%s9 + $0x7c] sm:$0xf]
    %v2267 = vld [vmem:[%s10] sm:$0x1]
    %v2269 = vperm.slane %v2267, 0
    %v2303 = vunpack.c.l.b16 %v2235
    %v2304 = vunpack.c.l.b16 %v2236
    %v2305 = vunpack.c.l.b16 %v2237
    %v2306 = vunpack.c.l.b16 %v2238
    %v2307 = vunpack.c.l.b16 %v2239
    %v2308 = vunpack.c.l.b16 %v2240
    %v2309 = vunpack.c.l.b16 %v2241
    %v2310 = vunpack.c.l.b16 %v2242
    %v2311 = vunpack.c.l.b16 %v2243
    %v2312 = vunpack.c.l.b16 %v2244
    %v2313 = vunpack.c.l.b16 %v2245
    %v2314 = vunpack.c.l.b16 %v2246
    %v2315 = vunpack.c.l.b16 %v2247
    %v2316 = vunpack.c.l.b16 %v2248
    %v2317 = vunpack.c.l.b16 %v2249
    %v2318 = vunpack.c.l.b16 %v2250
    %v2319 = vunpack.c.l.b16 %v2251
    %v2320 = vunpack.c.l.b16 %v2252
    %v2321 = vunpack.c.l.b16 %v2253
    %v2322 = vunpack.c.l.b16 %v2254
    %v2323 = vunpack.c.l.b16 %v2255
    %v2324 = vunpack.c.l.b16 %v2256
    %v2325 = vunpack.c.l.b16 %v2257
    %v2326 = vunpack.c.l.b16 %v2258
    %v2327 = vunpack.c.l.b16 %v2259
    %v2328 = vunpack.c.l.b16 %v2260
    %v2329 = vunpack.c.l.b16 %v2261
    %v2330 = vunpack.c.l.b16 %v2262
    %v2331 = vunpack.c.l.b16 %v2263
    %v2332 = vunpack.c.l.b16 %v2264
    %v2333 = vunpack.c.l.b16 %v2265
    %v2334 = vunpack.c.l.b16 %v2266
    %v2335 = vpack.c.b16 %v2304, %v2303
    %v2336 = vpack.c.b16 %v2306, %v2305
    %v2337 = vpack.c.b16 %v2308, %v2307
    %v2338 = vpack.c.b16 %v2310, %v2309
    %v2339 = vpack.c.b16 %v2312, %v2311
    %v2340 = vpack.c.b16 %v2314, %v2313
    %v2341 = vpack.c.b16 %v2316, %v2315
    %v2342 = vpack.c.b16 %v2318, %v2317
    %v2343 = vpack.c.b16 %v2320, %v2319
    %v2344 = vpack.c.b16 %v2322, %v2321
    %v2345 = vpack.c.b16 %v2324, %v2323
    %v2346 = vpack.c.b16 %v2326, %v2325
    %v2347 = vpack.c.b16 %v2328, %v2327
    %v2348 = vpack.c.b16 %v2330, %v2329
    %v2349 = vpack.c.b16 %v2332, %v2331
    %v2350 = vpack.c.b16 %v2334, %v2333
    %2367 = vmatpush.bf16.msra.mxu0 %v2342
    %2368 = vmatpush.bf16.msra.mxu0 %v2341
    %2369 = vmatpush.bf16.msra.mxu0 %v2340
    %2370 = vmatpush.bf16.msra.mxu0 %v2339
    %2371 = vmatpush.bf16.msra.mxu0 %v2338
    %2372 = vmatpush.bf16.msra.mxu0 %v2337
    %2373 = vmatpush.bf16.msra.mxu0 %v2336
    %2374 = vmatpush.bf16.msra.mxu0 %v2335
    %2375 = vmatmul.bf16.gmra.mxu0 %v2233
    %v2376 = vpop.f32.mrf.mxu0
    %v2377 = vadd.f32 %v2269, %v2376
    %v2378 = vpop.f32.mrf.mxu0
    %2379 = vdwg.mxu0
    %2380 = vmatpush.bf16.msra.mxu0 %v2350
    %2381 = vmatpush.bf16.msra.mxu0 %v2349
    %2382 = vmatpush.bf16.msra.mxu0 %v2348
    %2383 = vmatpush.bf16.msra.mxu0 %v2347
    %2384 = vmatpush.bf16.msra.mxu0 %v2346
    %2385 = vmatpush.bf16.msra.mxu0 %v2345
    %2386 = vmatpush.bf16.msra.mxu0 %v2344
    %2387 = vmatpush.bf16.msra.mxu0 %v2343
    %2388 = vmatmul.bf16.gmra.mxu0 %v2234
    %v2389 = vpop.f32.mrf.mxu0
    %v2390 = vadd.f32 %v2377, %v2389
    %v2391 = vpop.f32.mrf.mxu0
    %2392 = vdwg.mxu0
    %v2393 = vrot.slane %v2390, 4
    %v2394 = vadd.f32 %v2390, %v2393
    %v2395 = vrot.slane %v2394, 2
    %v2396 = vadd.f32 %v2394, %v2395
    %v2397 = vrot.slane %v2396, 1
    %v2398 = vadd.f32 %v2396, %v2397
    %v2399 = vmul.f32 %v2398, 0.125
    %v2400 = vsub.f32 %v2390, %v2399
    %v2401 = vmul.f32 %v2400, %v2400
    %v2402 = vrot.slane %v2401, 4
    %v2403 = vadd.f32 %v2401, %v2402
    %v2404 = vrot.slane %v2403, 2
    %v2405 = vadd.f32 %v2403, %v2404
    %v2406 = vrot.slane %v2405, 1
    %v2407 = vadd.f32 %v2405, %v2406
    %v2408 = vmul.f32 %v2407, 0.125
    %v2409 = vadd.f32 %v2408, 1e-05
    %v2410 = vrsqrt.pop %v2409
    %v2411 = vmul.f32 %v2410, %v2409
    %v2412 = vmul.f32 %v2411, %v2410
    %v2413 = vmul.f32 0.5, %v2412
    %v2414 = vsub.f32 1.5, %v2413
    %v2415 = vmul.f32 %v2410, %v2414
    %vm2416 = vweird.f32 %v2409
    %vm2417 = vweird.f32 %v2410
    %vm2418 = vmor %vm2416, %vm2417
    %v2419 = vsel %vm2418, %v2410, %v2415
    %v2420 = vmul.f32 %v2400, %v2419
    %v2421 = vld [vmem:[%s11] sm:$0x1]
    %v2423 = vperm.slane %v2421, 0
    %v2425 = vmul.f32 %v2420, %v2423
    %v2426 = vld [vmem:[%s12] sm:$0x1]
    %v2428 = vperm.slane %v2426, 0
    %v2430 = vadd.f32 %v2425, %v2428
    %v2431 = vpack.c.bf16 %v2430, %v2430
    %v2432 = vld [vmem:[%s13] sm:$0xf]
    %v2433 = vld [vmem:[%s13 + $0x4] sm:$0xf]
    %v2434 = vld [vmem:[%s13 + $0x8] sm:$0xf]
    %v2435 = vld [vmem:[%s13 + $0xc] sm:$0xf]
    %v2436 = vld [vmem:[%s13 + $0x10] sm:$0xf]
    %v2437 = vld [vmem:[%s13 + $0x14] sm:$0xf]
    %v2438 = vld [vmem:[%s13 + $0x18] sm:$0xf]
    %v2439 = vld [vmem:[%s13 + $0x1c] sm:$0xf]
    %v2440 = vld [vmem:[%s13 + $0x20] sm:$0xf]
    %v2441 = vld [vmem:[%s13 + $0x24] sm:$0xf]
    %v2442 = vld [vmem:[%s13 + $0x28] sm:$0xf]
    %v2443 = vld [vmem:[%s13 + $0x2c] sm:$0xf]
    %v2444 = vld [vmem:[%s13 + $0x30] sm:$0xf]
    %v2445 = vld [vmem:[%s13 + $0x34] sm:$0xf]
    %v2446 = vld [vmem:[%s13 + $0x38] sm:$0xf]
    %v2447 = vld [vmem:[%s13 + $0x3c] sm:$0xf]
    %v2448 = vld [vmem:[%s14] sm:$0x1]
    %v2450 = vperm.slane %v2448, 0
    %v2468 = vunpack.c.l.b16 %v2432
    %v2469 = vunpack.c.l.b16 %v2433
    %v2470 = vunpack.c.l.b16 %v2434
    %v2471 = vunpack.c.l.b16 %v2435
    %v2472 = vunpack.c.l.b16 %v2436
    %v2473 = vunpack.c.l.b16 %v2437
    %v2474 = vunpack.c.l.b16 %v2438
    %v2475 = vunpack.c.l.b16 %v2439
    %v2476 = vunpack.c.l.b16 %v2440
    %v2477 = vunpack.c.l.b16 %v2441
    %v2478 = vunpack.c.l.b16 %v2442
    %v2479 = vunpack.c.l.b16 %v2443
    %v2480 = vunpack.c.l.b16 %v2444
    %v2481 = vunpack.c.l.b16 %v2445
    %v2482 = vunpack.c.l.b16 %v2446
    %v2483 = vunpack.c.l.b16 %v2447
    %v2484 = vpack.c.b16 %v2469, %v2468
    %v2485 = vpack.c.b16 %v2471, %v2470
    %v2486 = vpack.c.b16 %v2473, %v2472
    %v2487 = vpack.c.b16 %v2475, %v2474
    %v2488 = vpack.c.b16 %v2477, %v2476
    %v2489 = vpack.c.b16 %v2479, %v2478
    %v2490 = vpack.c.b16 %v2481, %v2480
    %v2491 = vpack.c.b16 %v2483, %v2482
    %2500 = vmatpush.bf16.msra.mxu0 %v2491
    %2501 = vmatpush.bf16.msra.mxu0 %v2490
    %2502 = vmatpush.bf16.msra.mxu0 %v2489
    %2503 = vmatpush.bf16.msra.mxu0 %v2488
    %2504 = vmatpush.bf16.msra.mxu0 %v2487
    %2505 = vmatpush.bf16.msra.mxu0 %v2486
    %2506 = vmatpush.bf16.msra.mxu0 %v2485
    %2507 = vmatpush.bf16.msra.mxu0 %v2484
    %2508 = vmatmul.bf16.gmra.mxu0 %v2431
    %v2509 = vpop.f32.mrf.mxu0
    %v2510 = vadd.f32 %v2450, %v2509
    %v2511 = vpop.f32.mrf.mxu0
    %2512 = vdwg.mxu0
    %v2513 = vmax.f32 %v2510, 0.0
    %2514 = vst [vmem:[#allocation2] sm:$0xff] %v2513
    %v2515 = vpack.c.bf16 %v2513, %v2513
    %v2516 = vld [vmem:[%s15] sm:$0xf]
    %v2517 = vld [vmem:[%s15 + $0x4] sm:$0xf]
    %v2518 = vld [vmem:[%s15 + $0x8] sm:$0xf]
    %v2519 = vld [vmem:[%s15 + $0xc] sm:$0xf]
    %v2520 = vld [vmem:[%s15 + $0x10] sm:$0xf]
    %v2521 = vld [vmem:[%s15 + $0x14] sm:$0xf]
    %v2522 = vld [vmem:[%s15 + $0x18] sm:$0xf]
    %v2523 = vld [vmem:[%s15 + $0x1c] sm:$0xf]
    %v2524 = vld [vmem:[%s15 + $0x20] sm:$0xf]
    %v2525 = vld [vmem:[%s15 + $0x24] sm:$0xf]
    %v2526 = vld [vmem:[%s15 + $0x28] sm:$0xf]
    %v2527 = vld [vmem:[%s15 + $0x2c] sm:$0xf]
    %v2528 = vld [vmem:[%s15 + $0x30] sm:$0xf]
    %v2529 = vld [vmem:[%s15 + $0x34] sm:$0xf]
    %v2530 = vld [vmem:[%s15 + $0x38] sm:$0xf]
    %v2531 = vld [vmem:[%s15 + $0x3c] sm:$0xf]
    %v2532 = vld [vmem:[%s16] sm:$0x1]
    %v2534 = vperm.slane %v2532, 0
    %v2552 = vunpack.c.l.b16 %v2516
    %v2553 = vunpack.c.l.b16 %v2517
    %v2554 = vunpack.c.l.b16 %v2518
    %v2555 = vunpack.c.l.b16 %v2519
    %v2556 = vunpack.c.l.b16 %v2520
    %v2557 = vunpack.c.l.b16 %v2521
    %v2558 = vunpack.c.l.b16 %v2522
    %v2559 = vunpack.c.l.b16 %v2523
    %v2560 = vunpack.c.l.b16 %v2524
    %v2561 = vunpack.c.l.b16 %v2525
    %v2562 = vunpack.c.l.b16 %v2526
    %v2563 = vunpack.c.l.b16 %v2527
    %v2564 = vunpack.c.l.b16 %v2528
    %v2565 = vunpack.c.l.b16 %v2529
    %v2566 = vunpack.c.l.b16 %v2530
    %v2567 = vunpack.c.l.b16 %v2531
    %v2568 = vpack.c.b16 %v2553, %v2552
    %v2569 = vpack.c.b16 %v2555, %v2554
    %v2570 = vpack.c.b16 %v2557, %v2556
    %v2571 = vpack.c.b16 %v2559, %v2558
    %v2572 = vpack.c.b16 %v2561, %v2560
    %v2573 = vpack.c.b16 %v2563, %v2562
    %v2574 = vpack.c.b16 %v2565, %v2564
    %v2575 = vpack.c.b16 %v2567, %v2566
    %2584 = vmatpush.bf16.msra.mxu0 %v2575
    %2585 = vmatpush.bf16.msra.mxu0 %v2574
    %2586 = vmatpush.bf16.msra.mxu0 %v2573
    %2587 = vmatpush.bf16.msra.mxu0 %v2572
    %2588 = vmatpush.bf16.msra.mxu0 %v2571
    %2589 = vmatpush.bf16.msra.mxu0 %v2570
    %2590 = vmatpush.bf16.msra.mxu0 %v2569
    %2591 = vmatpush.bf16.msra.mxu0 %v2568
    %2592 = vmatmul.bf16.gmra.mxu0 %v2515
    %v2593 = vpop.f32.mrf.mxu0
    %v2594 = vadd.f32 %v2534, %v2593
    %v2595 = vpop.f32.mrf.mxu0
    %2596 = vdwg.mxu0
    %2597 = vst [vmem:[%s18] sm:$0xff] %v2594
    // Predicated region
    $region70: #{forward.1} parent=1 // pred_check
      _
    $region71: #{forward.1} parent=1 // pred_check_branch
      %2599 = sbr.rel (0) target = $region73
    $region72: #{forward.1} parent=1 // pred_region
      %2601 = vsyncadd [#allocation3], 0
      %s2603 = sshll.u32 [#allocation2], 4
      %s2604 = int_to_ptr.vmem [resolvable:$true] %s2603
      %s2605 = sshll.u32 %s17, 4
      %s2606 = int_to_ptr.hbm [resolvable:$true] %s2605
      %2608 = dma.vmem_to_hbm [thread:$0]  %s2604, 128, %s2606, [#allocation3]
    $region73: #{forward.1} parent=1 // pred_fallthru
      _
    // Predicated region
    $region74: #{forward.1} parent=1 // pred_check
      _
    $region75: #{forward.1} parent=1 // pred_check_branch
      %2610 = sbr.rel (0) target = $region77
    $region76: #{forward.1} parent=1 // pred_region
      _
    $region77: #{forward.1} parent=1 // pred_fallthru
      _
    // Predicated region
    $region78: #{forward.1} parent=1 // pred_check
      _
    $region79: #{forward.1} parent=1 // pred_check_branch
      %2612 = sbr.rel (0) target = $region81
    $region80: #{forward.1} parent=1 // pred_region
      %2614 = dma.done [#allocation3], 128
    $region81: #{forward.1} parent=1 // pred_fallthru
      _
    // Predicated region
    $region82: #{forward.1} parent=1 // pred_check
      _
    $region83: #{forward.1} parent=1 // pred_check_branch
      %2616 = sbr.rel (0) target = $region85
    $region84: #{forward.1} parent=1 // pred_region
      _
    $region85: #{forward.1} parent=1 // pred_fallthru
      _
    %2617 = vsyncpa [#allocation3], 1

</llo_original>
